<compile_context>
chip_gen: v6e
topology: v6e:2x2x1
jax: 0.10.0
libtpu: 0.0.40
codegen_flags: <defaults>
</compile_context>

<pallas_src>
import math

import jax
import jax.numpy as jnp
from jax.experimental import pallas as pl
from jax.experimental.pallas import tpu as pltpu


T_DIM = 16
HIDDEN = 256
IN_PAD = 128    # padded lane width of the kernel input [temb | x | state | 0]
TH_PAD = 128    # padded lane width of the time-MLP hidden (>= 2*T_DIM)
OUT_PAD = 128   # padded lane width of the output (>= action_dim)


def _round_up(n, m):
    return ((n + m - 1) // m) * m


def _default_bf16_mish():
    """bf16 Mish only on chips with a bf16 VPU/EUP (v6e, v7x)."""
    try:
        kind = jax.devices()[0].device_kind.lower()
    except Exception:
        return False
    return any(tag in kind for tag in ("v6", "v7", "7x"))


def _mish_f32(v):
    # mish(x) = x * tanh(softplus(x)) = x * ((1+e^x)^2 - 1) / ((1+e^x)^2 + 1)
    # One EUP exp + near-free approx reciprocal; clamp keeps (1+p)^2 finite
    # (for v >= 20 the tanh factor is 1.0 to f32 precision anyway).
    p = jnp.exp(jnp.minimum(v, 20.0))
    q = (1.0 + p) * (1.0 + p)
    return v * (q - 1.0) * pl.reciprocal(q + 1.0, approx=True)


def _mish_bf16(v):
    # Same formula, evaluated on the bf16 VPU/EUP; output feeds the next
    # bf16 MXU dot directly (no extra cast).
    v = v.astype(jnp.bfloat16)
    p = jnp.exp(jnp.minimum(v, 20.0))
    q = (1.0 + p) * (1.0 + p)
    return v * (q - 1.0) / (q + 1.0)


def _make_kernel(use_bf16_mish):
    mish = _mish_bf16 if use_bf16_mish else _mish_f32
    f32 = jnp.float32
    bf16 = jnp.bfloat16

    def kernel(time_ref, xs_ref, freq_ref, phase_ref,
               w1cat_ref, bcat_ref, w1t_ref,
               w2_ref, b2_ref, w3_ref, b3_ref,
               wf_ref, bf_ref, out_ref):
        # In-kernel sinusoidal embedding of the diffusion step:
        #   lanes [0,8)  : sin(t * f_j)
        #   lanes [8,16) : sin(t * f_j + pi/2) == cos(t * f_j)
        #   lanes >= 16  : freq = phase = 0  ->  sin(0) = 0
        arg = time_ref[...] * freq_ref[...] + phase_ref[...]      # (TB, 128)
        xin = (xs_ref[...] + jnp.sin(arg)).astype(bf16)           # disjoint lanes

        # Fused layer 1: [time-MLP layer1 | mid-layer1 (x/state rows)] share LHS.
        h01 = jnp.dot(xin, w1cat_ref[...], preferred_element_type=f32) + bcat_ref[...]
        h_t = mish(h01[:, :TH_PAD])                               # time-MLP hidden
        # mid layer 1: x/state partial + mish(t1) @ (wt2 @ W1t)  (layer-2 folded)
        h = mish(h01[:, TH_PAD:]
                 + jnp.dot(h_t.astype(bf16), w1t_ref[...], preferred_element_type=f32))

        # mid layers 2 & 3
        h = mish(jnp.dot(h.astype(bf16), w2_ref[...], preferred_element_type=f32)
                 + b2_ref[...])
        h = mish(jnp.dot(h.astype(bf16), w3_ref[...], preferred_element_type=f32)
                 + b3_ref[...])

        # final layer, lane-dense (N padded to 128)
        out_ref[...] = (jnp.dot(h.astype(bf16), wf_ref[...], preferred_element_type=f32)
                        + bf_ref[...])

    return kernel


def make_params(key, state_dim, action_dim, t_dim=T_DIM, hidden=HIDDEN):
    """PyTorch-style uniform(-1/sqrt(fan_in), 1/sqrt(fan_in)) init, (in, out) layout."""
    def linear(k, fan_in, fan_out):
        kw, kb = jax.random.split(k)
        bound = 1.0 / math.sqrt(fan_in)
        w = jax.random.uniform(kw, (fan_in, fan_out), jnp.float32, -bound, bound)
        b = jax.random.uniform(kb, (fan_out,), jnp.float32, -bound, bound)
        return w, b

    ks = jax.random.split(key, 6)
    wt1, bt1 = linear(ks[0], t_dim, 2 * t_dim)
    wt2, bt2 = linear(ks[1], 2 * t_dim, t_dim)
    input_dim = state_dim + action_dim + t_dim
    w1, b1 = linear(ks[2], input_dim, hidden)
    w2, b2 = linear(ks[3], hidden, hidden)
    w3, b3 = linear(ks[4], hidden, hidden)
    wf, bf = linear(ks[5], hidden, action_dim)
    return (wt1, bt1, wt2, bt2, w1, b1, w2, b2, w3, b3, wf, bf)


def prepare_params(params, state_dim, action_dim, t_dim=T_DIM, hidden=HIDDEN):
    """Fold / pad / cast the raw f32 params into lane-dense bf16 kernel operands."""
    (wt1, bt1, wt2, bt2, w1, b1, w2, b2, w3, b3, wf, bf) = params
    assert t_dim + action_dim + state_dim <= IN_PAD
    assert 2 * t_dim <= TH_PAD and action_dim <= OUT_PAD

    # raw W1 rows follow torch.cat([x, t, state], dim=1)
    w1x = w1[:action_dim]
    w1t = w1[action_dim:action_dim + t_dim]
    w1s = w1[action_dim + t_dim:]

    # kernel input column layout: [temb (0:t_dim), x, state, zero-pad]
    wt1_p = jnp.zeros((IN_PAD, TH_PAD), jnp.float32).at[:t_dim, :2 * t_dim].set(wt1)
    bt1_p = jnp.zeros((1, TH_PAD), jnp.float32).at[0, :2 * t_dim].set(bt1)

    # time-MLP layer 2 folded into the layer-1 weight / bias for the time path
    w1t_fold = wt2 @ w1t                                   # (2*t_dim, hidden)
    w1t_p = jnp.zeros((TH_PAD, hidden), jnp.float32).at[:2 * t_dim].set(w1t_fold)

    w1xs_p = (jnp.zeros((IN_PAD, hidden), jnp.float32)
              .at[t_dim:t_dim + action_dim].set(w1x)
              .at[t_dim + action_dim:t_dim + action_dim + state_dim].set(w1s))
    b1_p = (b1 + bt2 @ w1t).reshape(1, hidden)

    # fuse the two layer-1 dots that share the same LHS into one matmul
    w1cat = jnp.concatenate([wt1_p, w1xs_p], axis=1)       # (128, 384)
    bcat = jnp.concatenate([bt1_p, b1_p], axis=1)          # (1, 384)

    wf_p = jnp.zeros((hidden, OUT_PAD), jnp.float32).at[:, :action_dim].set(wf)
    bf_p = jnp.zeros((1, OUT_PAD), jnp.float32).at[0, :action_dim].set(bf)

    # in-kernel sinusoidal embedding tables: temb = sin(time * freq + phase)
    half = t_dim // 2
    scale = math.log(10000.0) / (half - 1)
    freqs = jnp.exp(-scale * jnp.arange(half, dtype=jnp.float32))
    freq_row = (jnp.zeros((1, IN_PAD), jnp.float32)
                .at[0, :half].set(freqs)
                .at[0, half:2 * half].set(freqs))
    phase_row = jnp.zeros((1, IN_PAD), jnp.float32).at[0, half:2 * half].set(math.pi / 2)

    bf16 = jnp.bfloat16
    return (freq_row, phase_row,
            w1cat.astype(bf16), bcat,
            w1t_p.astype(bf16),
            w2.astype(bf16), b2.reshape(1, hidden),
            w3.astype(bf16), b3.reshape(1, hidden),
            wf_p.astype(bf16), bf_p)


def mlp_forward(x, time, state, prep, action_dim, use_bf16_mish=False):
    B = x.shape[0]
    xs = jnp.concatenate([x, state], axis=1).astype(jnp.float32)   # (B, a+s)

    # Batch tile: multiple of 16 (bf16 sublane packing), up to 512 to amortize
    # the ~0.35us/grid-step overhead; once B >= 32 force >= 2 grid steps so the
    # "parallel" axis can shard across both TensorCores on v7x (no-op on 1-TC
    # chips beyond one extra cheap step).
    TB = min(512, _round_up(max(B, 1), 16))
    if B >= 32:
        TB = min(TB, _round_up((B + 1) // 2, 16))
    Bp = _round_up(B, TB)

    xs_pad = jnp.pad(xs, ((0, Bp - B), (T_DIM, IN_PAD - T_DIM - xs.shape[1])))
    time_col = jnp.pad(time.astype(jnp.float32).reshape(B, 1), ((0, Bp - B), (0, 0)))

    def row_spec(width):
        return pl.BlockSpec((TB, width), lambda i: (i, 0))

    def const_spec(p):
        # constant block index -> fetched once, VMEM-resident across grid steps
        return pl.BlockSpec(p.shape, lambda i: (0, 0))

    out = pl.pallas_call(
        _make_kernel(use_bf16_mish),
        out_shape=jax.ShapeDtypeStruct((Bp, OUT_PAD), jnp.float32),
        grid=(Bp // TB,),
        in_specs=[row_spec(1), row_spec(IN_PAD)] + [const_spec(p) for p in prep],
        out_specs=row_spec(OUT_PAD),
        compiler_params=pltpu.CompilerParams(
            dimension_semantics=("parallel",)),
    )(time_col, xs_pad, *prep)
    return out[:B, :action_dim]


def mlp_pipeline_ref(x, time, state, prep, use_bf16_mish):
    """Pure-JAX mirror of the exact kernel pipeline (bf16 dots, f32 accumulate)."""
    (freq_row, phase_row, w1cat, bcat, w1t_p, w2, b2, w3, b3, wf_p, bf_p) = prep
    f32, bf16 = jnp.float32, jnp.bfloat16
    B = x.shape[0]

    xs = jnp.concatenate([x, state], axis=1).astype(f32)
    xs_pad = jnp.pad(xs, ((0, 0), (T_DIM, IN_PAD - T_DIM - xs.shape[1])))
    arg = time.astype(f32).reshape(B, 1) * freq_row + phase_row
    xin = (xs_pad + jnp.sin(arg)).astype(bf16)

    def dot(a, b):
        return jnp.dot(a.astype(bf16), b, preferred_element_type=f32)

    def mish(v):
        if use_bf16_mish:
            v = v.astype(bf16)
        p = jnp.exp(jnp.minimum(v, 20.0))
        q = (1.0 + p) * (1.0 + p)
        return v * (q - 1.0) / (q + 1.0)

    h01 = dot(xin, w1cat) + bcat
    h_t = mish(h01[:, :TH_PAD])
    h = mish(h01[:, TH_PAD:] + dot(h_t, w1t_p))
    h = mish(dot(h, w2) + b2)
    h = mish(dot(h, w3) + b3)
    return dot(h, wf_p) + bf_p


def sinusoidal_pos_emb(time, dim=T_DIM):
    half = dim // 2
    scale = math.log(10000.0) / (half - 1)
    freqs = jnp.exp(-scale * jnp.arange(half, dtype=jnp.float32))
    emb = time.astype(jnp.float32)[:, None] * freqs[None, :]
    return jnp.concatenate([jnp.sin(emb), jnp.cos(emb)], axis=-1)


def mlp_forward_ref(x, time, state, params):
    """Pure f32 reference matching the original PyTorch module math."""
    (wt1, bt1, wt2, bt2, w1, b1, w2, b2, w3, b3, wf, bf) = params
    mish = lambda v: v * jnp.tanh(jnp.log1p(jnp.exp(v)))
    temb = sinusoidal_pos_emb(time)
    t = mish(temb @ wt1 + bt1) @ wt2 + bt2
    h = jnp.concatenate([x, t, state], axis=1)
    h = mish(h @ w1 + b1)
    h = mish(h @ w2 + b2)
    h = mish(h @ w3 + b3)
    return h @ wf + bf


if __name__ == "__main__":
    state_dim, action_dim, batch = 17, 6, 2

    key = jax.random.PRNGKey(0)
    k_params, k_x, k_t, k_s = jax.random.split(key, 4)

    params = make_params(k_params, state_dim, action_dim)
    prep = prepare_params(params, state_dim, action_dim)

    x = jax.random.normal(k_x, (batch, action_dim), jnp.float32)       # noisy action
    time = jax.random.uniform(k_t, (batch,), jnp.float32, 0.0, 100.0)  # diffusion step
    state = jax.random.normal(k_s, (batch, state_dim), jnp.float32)

    use_bf16_mish = _default_bf16_mish()

    fwd = jax.jit(lambda x_, t_, s_: mlp_forward(
        x_, t_, s_, prep, action_dim, use_bf16_mish=use_bf16_mish))
    out = jax.block_until_ready(fwd(x, time, state))
    assert out.shape == (batch, action_dim)

    # 1) tight check against the exact (folded/padded/bf16) pipeline.
    #    bf16 Mish legitimately adds ~bf16-ulp noise per layer -> looser bound.
    ref_pipe = mlp_pipeline_ref(x, time, state, prep, use_bf16_mish)[:, :action_dim]
    tol = 4e-2 if use_bf16_mish else 1e-2
    assert jnp.allclose(out, ref_pipe, atol=tol, rtol=tol), "mismatch vs pipeline ref"

    # 2) sanity check against the original f32 module math (bf16 quantization noise only)
    ref_f32 = mlp_forward_ref(x, time, state, params)
    assert jnp.allclose(out, ref_f32, atol=1e-1, rtol=1e-1), "mismatch vs f32 reference"

    print("KERNEL_OK")
</pallas_src>

<mosaic_0001>
module attributes {stable_mosaic.version = 11 : i64} {
  func.func @kernel(%arg0: i32, %arg1: memref<16x1xf32, #tpu.memory_space<vmem>>, %arg2: memref<16x128xf32, #tpu.memory_space<vmem>>, %arg3: memref<1x128xf32, #tpu.memory_space<vmem>>, %arg4: memref<1x128xf32, #tpu.memory_space<vmem>>, %arg5: memref<128x384xbf16, #tpu.memory_space<vmem>>, %arg6: memref<1x384xf32, #tpu.memory_space<vmem>>, %arg7: memref<128x256xbf16, #tpu.memory_space<vmem>>, %arg8: memref<256x256xbf16, #tpu.memory_space<vmem>>, %arg9: memref<1x256xf32, #tpu.memory_space<vmem>>, %arg10: memref<256x256xbf16, #tpu.memory_space<vmem>>, %arg11: memref<1x256xf32, #tpu.memory_space<vmem>>, %arg12: memref<256x128xbf16, #tpu.memory_space<vmem>>, %arg13: memref<1x128xf32, #tpu.memory_space<vmem>>, %arg14: memref<16x128xf32, #tpu.memory_space<vmem>>) attributes {dimension_semantics = [#tpu.dimension_semantics<parallel>], iteration_bounds = array<i64: 1>, scalar_prefetch = 0 : i64, scratch_operands = 0 : i64, tpu.core_type = #tpu.core_type<tc>, window_params = [{transform_indices = @transform_0, window_bounds = array<i64: 16, 1>}, {transform_indices = @transform_1, window_bounds = array<i64: 16, 128>}, {pipeline_mode = #tpu.pipeline_mode<synchronous>, transform_indices = @transform_2, window_bounds = array<i64: 1, 128>}, {pipeline_mode = #tpu.pipeline_mode<synchronous>, transform_indices = @transform_3, window_bounds = array<i64: 1, 128>}, {pipeline_mode = #tpu.pipeline_mode<synchronous>, transform_indices = @transform_4, window_bounds = array<i64: 128, 384>}, {pipeline_mode = #tpu.pipeline_mode<synchronous>, transform_indices = @transform_5, window_bounds = array<i64: 1, 384>}, {pipeline_mode = #tpu.pipeline_mode<synchronous>, transform_indices = @transform_6, window_bounds = array<i64: 128, 256>}, {pipeline_mode = #tpu.pipeline_mode<synchronous>, transform_indices = @transform_7, window_bounds = array<i64: 256, 256>}, {pipeline_mode = #tpu.pipeline_mode<synchronous>, transform_indices = @transform_8, window_bounds = array<i64: 1, 256>}, {pipeline_mode = #tpu.pipeline_mode<synchronous>, transform_indices = @transform_9, window_bounds = array<i64: 256, 256>}, {pipeline_mode = #tpu.pipeline_mode<synchronous>, transform_indices = @transform_10, window_bounds = array<i64: 1, 256>}, {pipeline_mode = #tpu.pipeline_mode<synchronous>, transform_indices = @transform_11, window_bounds = array<i64: 256, 128>}, {pipeline_mode = #tpu.pipeline_mode<synchronous>, transform_indices = @transform_12, window_bounds = array<i64: 1, 128>}, {transform_indices = @transform_13, window_bounds = array<i64: 16, 128>}]} {
    %c0 = arith.constant 0 : index
    %c0_0 = arith.constant 0 : index
    %0 = vector.load %arg1[%c0, %c0_0] : memref<16x1xf32, #tpu.memory_space<vmem>>, vector<16x1xf32>
    %c0_1 = arith.constant 0 : index
    %c0_2 = arith.constant 0 : index
    %1 = vector.load %arg3[%c0_1, %c0_2] : memref<1x128xf32, #tpu.memory_space<vmem>>, vector<1x128xf32>
    %2 = vector.broadcast %0 : vector<16x1xf32> to vector<16x128xf32>
    %3 = vector.broadcast %1 : vector<1x128xf32> to vector<16x128xf32>
    %4 = arith.mulf %2, %3 : vector<16x128xf32>
    %c0_3 = arith.constant 0 : index
    %c0_4 = arith.constant 0 : index
    %5 = vector.load %arg4[%c0_3, %c0_4] : memref<1x128xf32, #tpu.memory_space<vmem>>, vector<1x128xf32>
    %6 = vector.broadcast %5 : vector<1x128xf32> to vector<16x128xf32>
    %7 = arith.addf %4, %6 : vector<16x128xf32>
    %c0_5 = arith.constant 0 : index
    %c0_6 = arith.constant 0 : index
    %8 = vector.load %arg2[%c0_5, %c0_6] : memref<16x128xf32, #tpu.memory_space<vmem>>, vector<16x128xf32>
    %9 = math.sin %7 : vector<16x128xf32>
    %10 = arith.addf %8, %9 : vector<16x128xf32>
    %11 = arith.truncf %10 : vector<16x128xf32> to vector<16x128xbf16>
    %c0_7 = arith.constant 0 : index
    %c0_8 = arith.constant 0 : index
    %12 = vector.load %arg5[%c0_7, %c0_8] : memref<128x384xbf16, #tpu.memory_space<vmem>>, vector<128x384xbf16>
    %cst = arith.constant dense<0.000000e+00> : vector<16x384xf32>
    %13 = tpu.matmul %11, %12, %cst {dimension_numbers = #tpu.dot_dimension_numbers<[1], [0], [0], [1], [0, 0, 1, 1], [], []>} : vector<16x128xbf16>, vector<128x384xbf16>, vector<16x384xf32> -> vector<16x384xf32>
    %c0_9 = arith.constant 0 : index
    %c0_10 = arith.constant 0 : index
    %14 = vector.load %arg6[%c0_9, %c0_10] : memref<1x384xf32, #tpu.memory_space<vmem>>, vector<1x384xf32>
    %15 = vector.broadcast %14 : vector<1x384xf32> to vector<16x384xf32>
    %16 = arith.addf %13, %15 : vector<16x384xf32>
    %17 = vector.extract_strided_slice %16 {offsets = [0, 0], sizes = [16, 128], strides = [1, 1]} : vector<16x384xf32> to vector<16x128xf32>
    %cst_11 = arith.constant 2.000000e+01 : f32
    %18 = vector.broadcast %cst_11 : f32 to vector<16x128xf32>
    %19 = arith.minimumf %17, %18 : vector<16x128xf32>
    %20 = math.exp %19 : vector<16x128xf32>
    %cst_12 = arith.constant 1.000000e+00 : f32
    %21 = vector.broadcast %cst_12 : f32 to vector<16x128xf32>
    %22 = arith.addf %21, %20 : vector<16x128xf32>
    %cst_13 = arith.constant 1.000000e+00 : f32
    %23 = vector.broadcast %cst_13 : f32 to vector<16x128xf32>
    %24 = arith.addf %23, %20 : vector<16x128xf32>
    %25 = arith.mulf %22, %24 : vector<16x128xf32>
    %cst_14 = arith.constant 1.000000e+00 : f32
    %26 = vector.broadcast %cst_14 : f32 to vector<16x128xf32>
    %27 = arith.subf %25, %26 : vector<16x128xf32>
    %28 = arith.mulf %17, %27 : vector<16x128xf32>
    %cst_15 = arith.constant 1.000000e+00 : f32
    %29 = vector.broadcast %cst_15 : f32 to vector<16x128xf32>
    %30 = arith.addf %25, %29 : vector<16x128xf32>
    %31 = tpu.reciprocal %30 {approx = true} : vector<16x128xf32> -> vector<16x128xf32>
    %32 = arith.mulf %28, %31 : vector<16x128xf32>
    %33 = vector.extract_strided_slice %16 {offsets = [0, 128], sizes = [16, 256], strides = [1, 1]} : vector<16x384xf32> to vector<16x256xf32>
    %34 = arith.truncf %32 : vector<16x128xf32> to vector<16x128xbf16>
    %c0_16 = arith.constant 0 : index
    %c0_17 = arith.constant 0 : index
    %35 = vector.load %arg7[%c0_16, %c0_17] : memref<128x256xbf16, #tpu.memory_space<vmem>>, vector<128x256xbf16>
    %cst_18 = arith.constant dense<0.000000e+00> : vector<16x256xf32>
    %36 = tpu.matmul %34, %35, %cst_18 {dimension_numbers = #tpu.dot_dimension_numbers<[1], [0], [0], [1], [0, 0, 1, 1], [], []>} : vector<16x128xbf16>, vector<128x256xbf16>, vector<16x256xf32> -> vector<16x256xf32>
    %37 = arith.addf %33, %36 : vector<16x256xf32>
    %cst_19 = arith.constant 2.000000e+01 : f32
    %38 = vector.broadcast %cst_19 : f32 to vector<16x256xf32>
    %39 = arith.minimumf %37, %38 : vector<16x256xf32>
    %40 = math.exp %39 : vector<16x256xf32>
    %cst_20 = arith.constant 1.000000e+00 : f32
    %41 = vector.broadcast %cst_20 : f32 to vector<16x256xf32>
    %42 = arith.addf %41, %40 : vector<16x256xf32>
    %cst_21 = arith.constant 1.000000e+00 : f32
    %43 = vector.broadcast %cst_21 : f32 to vector<16x256xf32>
    %44 = arith.addf %43, %40 : vector<16x256xf32>
    %45 = arith.mulf %42, %44 : vector<16x256xf32>
    %cst_22 = arith.constant 1.000000e+00 : f32
    %46 = vector.broadcast %cst_22 : f32 to vector<16x256xf32>
    %47 = arith.subf %45, %46 : vector<16x256xf32>
    %48 = arith.mulf %37, %47 : vector<16x256xf32>
    %cst_23 = arith.constant 1.000000e+00 : f32
    %49 = vector.broadcast %cst_23 : f32 to vector<16x256xf32>
    %50 = arith.addf %45, %49 : vector<16x256xf32>
    %51 = tpu.reciprocal %50 {approx = true} : vector<16x256xf32> -> vector<16x256xf32>
    %52 = arith.mulf %48, %51 : vector<16x256xf32>
    %53 = arith.truncf %52 : vector<16x256xf32> to vector<16x256xbf16>
    %c0_24 = arith.constant 0 : index
    %c0_25 = arith.constant 0 : index
    %54 = vector.load %arg8[%c0_24, %c0_25] : memref<256x256xbf16, #tpu.memory_space<vmem>>, vector<256x256xbf16>
    %cst_26 = arith.constant dense<0.000000e+00> : vector<16x256xf32>
    %55 = tpu.matmul %53, %54, %cst_26 {dimension_numbers = #tpu.dot_dimension_numbers<[1], [0], [0], [1], [0, 0, 1, 1], [], []>} : vector<16x256xbf16>, vector<256x256xbf16>, vector<16x256xf32> -> vector<16x256xf32>
    %c0_27 = arith.constant 0 : index
    %c0_28 = arith.constant 0 : index
    %56 = vector.load %arg9[%c0_27, %c0_28] : memref<1x256xf32, #tpu.memory_space<vmem>>, vector<1x256xf32>
    %57 = vector.broadcast %56 : vector<1x256xf32> to vector<16x256xf32>
    %58 = arith.addf %55, %57 : vector<16x256xf32>
    %cst_29 = arith.constant 2.000000e+01 : f32
    %59 = vector.broadcast %cst_29 : f32 to vector<16x256xf32>
    %60 = arith.minimumf %58, %59 : vector<16x256xf32>
    %61 = math.exp %60 : vector<16x256xf32>
    %cst_30 = arith.constant 1.000000e+00 : f32
    %62 = vector.broadcast %cst_30 : f32 to vector<16x256xf32>
    %63 = arith.addf %62, %61 : vector<16x256xf32>
    %cst_31 = arith.constant 1.000000e+00 : f32
    %64 = vector.broadcast %cst_31 : f32 to vector<16x256xf32>
    %65 = arith.addf %64, %61 : vector<16x256xf32>
    %66 = arith.mulf %63, %65 : vector<16x256xf32>
    %cst_32 = arith.constant 1.000000e+00 : f32
    %67 = vector.broadcast %cst_32 : f32 to vector<16x256xf32>
    %68 = arith.subf %66, %67 : vector<16x256xf32>
    %69 = arith.mulf %58, %68 : vector<16x256xf32>
    %cst_33 = arith.constant 1.000000e+00 : f32
    %70 = vector.broadcast %cst_33 : f32 to vector<16x256xf32>
    %71 = arith.addf %66, %70 : vector<16x256xf32>
    %72 = tpu.reciprocal %71 {approx = true} : vector<16x256xf32> -> vector<16x256xf32>
    %73 = arith.mulf %69, %72 : vector<16x256xf32>
    %74 = arith.truncf %73 : vector<16x256xf32> to vector<16x256xbf16>
    %c0_34 = arith.constant 0 : index
    %c0_35 = arith.constant 0 : index
    %75 = vector.load %arg10[%c0_34, %c0_35] : memref<256x256xbf16, #tpu.memory_space<vmem>>, vector<256x256xbf16>
    %cst_36 = arith.constant dense<0.000000e+00> : vector<16x256xf32>
    %76 = tpu.matmul %74, %75, %cst_36 {dimension_numbers = #tpu.dot_dimension_numbers<[1], [0], [0], [1], [0, 0, 1, 1], [], []>} : vector<16x256xbf16>, vector<256x256xbf16>, vector<16x256xf32> -> vector<16x256xf32>
    %c0_37 = arith.constant 0 : index
    %c0_38 = arith.constant 0 : index
    %77 = vector.load %arg11[%c0_37, %c0_38] : memref<1x256xf32, #tpu.memory_space<vmem>>, vector<1x256xf32>
    %78 = vector.broadcast %77 : vector<1x256xf32> to vector<16x256xf32>
    %79 = arith.addf %76, %78 : vector<16x256xf32>
    %cst_39 = arith.constant 2.000000e+01 : f32
    %80 = vector.broadcast %cst_39 : f32 to vector<16x256xf32>
    %81 = arith.minimumf %79, %80 : vector<16x256xf32>
    %82 = math.exp %81 : vector<16x256xf32>
    %cst_40 = arith.constant 1.000000e+00 : f32
    %83 = vector.broadcast %cst_40 : f32 to vector<16x256xf32>
    %84 = arith.addf %83, %82 : vector<16x256xf32>
    %cst_41 = arith.constant 1.000000e+00 : f32
    %85 = vector.broadcast %cst_41 : f32 to vector<16x256xf32>
    %86 = arith.addf %85, %82 : vector<16x256xf32>
    %87 = arith.mulf %84, %86 : vector<16x256xf32>
    %cst_42 = arith.constant 1.000000e+00 : f32
    %88 = vector.broadcast %cst_42 : f32 to vector<16x256xf32>
    %89 = arith.subf %87, %88 : vector<16x256xf32>
    %90 = arith.mulf %79, %89 : vector<16x256xf32>
    %cst_43 = arith.constant 1.000000e+00 : f32
    %91 = vector.broadcast %cst_43 : f32 to vector<16x256xf32>
    %92 = arith.addf %87, %91 : vector<16x256xf32>
    %93 = tpu.reciprocal %92 {approx = true} : vector<16x256xf32> -> vector<16x256xf32>
    %94 = arith.mulf %90, %93 : vector<16x256xf32>
    %95 = arith.truncf %94 : vector<16x256xf32> to vector<16x256xbf16>
    %c0_44 = arith.constant 0 : index
    %c0_45 = arith.constant 0 : index
    %96 = vector.load %arg12[%c0_44, %c0_45] : memref<256x128xbf16, #tpu.memory_space<vmem>>, vector<256x128xbf16>
    %cst_46 = arith.constant dense<0.000000e+00> : vector<16x128xf32>
    %97 = tpu.matmul %95, %96, %cst_46 {dimension_numbers = #tpu.dot_dimension_numbers<[1], [0], [0], [1], [0, 0, 1, 1], [], []>} : vector<16x256xbf16>, vector<256x128xbf16>, vector<16x128xf32> -> vector<16x128xf32>
    %c0_47 = arith.constant 0 : index
    %c0_48 = arith.constant 0 : index
    %98 = vector.load %arg13[%c0_47, %c0_48] : memref<1x128xf32, #tpu.memory_space<vmem>>, vector<1x128xf32>
    %99 = vector.broadcast %98 : vector<1x128xf32> to vector<16x128xf32>
    %100 = arith.addf %97, %99 : vector<16x128xf32>
    %c0_49 = arith.constant 0 : index
    %c0_50 = arith.constant 0 : index
    %101 = vector.load %arg14[%c0_49, %c0_50] : memref<16x128xf32, #tpu.memory_space<vmem>>, vector<16x128xf32>
    tpu.vector_store %arg14[%c0_49, %c0_50], %100 {strides = array<i32>} : memref<16x128xf32, #tpu.memory_space<vmem>>, vector<16x128xf32>,
    return
  }
  func.func @transform_0(%arg0: i32) -> (i32, i32) {
    %c0_i32 = arith.constant 0 : i32
    %c0_i32_0 = arith.constant 0 : i32
    return %arg0, %c0_i32 : i32, i32
  }
  func.func @transform_1(%arg0: i32) -> (i32, i32) {
    %c0_i32 = arith.constant 0 : i32
    %c0_i32_0 = arith.constant 0 : i32
    return %arg0, %c0_i32 : i32, i32
  }
  func.func @transform_2(%arg0: i32) -> (i32, i32) {
    %c0_i32 = arith.constant 0 : i32
    %c0_i32_0 = arith.constant 0 : i32
    %c0_i32_1 = arith.constant 0 : i32
    return %c0_i32, %c0_i32_0 : i32, i32
  }
  func.func @transform_3(%arg0: i32) -> (i32, i32) {
    %c0_i32 = arith.constant 0 : i32
    %c0_i32_0 = arith.constant 0 : i32
    %c0_i32_1 = arith.constant 0 : i32
    return %c0_i32, %c0_i32_0 : i32, i32
  }
  func.func @transform_4(%arg0: i32) -> (i32, i32) {
    %c0_i32 = arith.constant 0 : i32
    %c0_i32_0 = arith.constant 0 : i32
    %c0_i32_1 = arith.constant 0 : i32
    return %c0_i32, %c0_i32_0 : i32, i32
  }
  func.func @transform_5(%arg0: i32) -> (i32, i32) {
    %c0_i32 = arith.constant 0 : i32
    %c0_i32_0 = arith.constant 0 : i32
    %c0_i32_1 = arith.constant 0 : i32
    return %c0_i32, %c0_i32_0 : i32, i32
  }
  func.func @transform_6(%arg0: i32) -> (i32, i32) {
    %c0_i32 = arith.constant 0 : i32
    %c0_i32_0 = arith.constant 0 : i32
    %c0_i32_1 = arith.constant 0 : i32
    return %c0_i32, %c0_i32_0 : i32, i32
  }
  func.func @transform_7(%arg0: i32) -> (i32, i32) {
    %c0_i32 = arith.constant 0 : i32
    %c0_i32_0 = arith.constant 0 : i32
    %c0_i32_1 = arith.constant 0 : i32
    return %c0_i32, %c0_i32_0 : i32, i32
  }
  func.func @transform_8(%arg0: i32) -> (i32, i32) {
    %c0_i32 = arith.constant 0 : i32
    %c0_i32_0 = arith.constant 0 : i32
    %c0_i32_1 = arith.constant 0 : i32
    return %c0_i32, %c0_i32_0 : i32, i32
  }
  func.func @transform_9(%arg0: i32) -> (i32, i32) {
    %c0_i32 = arith.constant 0 : i32
    %c0_i32_0 = arith.constant 0 : i32
    %c0_i32_1 = arith.constant 0 : i32
    return %c0_i32, %c0_i32_0 : i32, i32
  }
  func.func @transform_10(%arg0: i32) -> (i32, i32) {
    %c0_i32 = arith.constant 0 : i32
    %c0_i32_0 = arith.constant 0 : i32
    %c0_i32_1 = arith.constant 0 : i32
    return %c0_i32, %c0_i32_0 : i32, i32
  }
  func.func @transform_11(%arg0: i32) -> (i32, i32) {
    %c0_i32 = arith.constant 0 : i32
    %c0_i32_0 = arith.constant 0 : i32
    %c0_i32_1 = arith.constant 0 : i32
    return %c0_i32, %c0_i32_0 : i32, i32
  }
  func.func @transform_12(%arg0: i32) -> (i32, i32) {
    %c0_i32 = arith.constant 0 : i32
    %c0_i32_0 = arith.constant 0 : i32
    %c0_i32_1 = arith.constant 0 : i32
    return %c0_i32, %c0_i32_0 : i32, i32
  }
  func.func @transform_13(%arg0: i32) -> (i32, i32) {
    %c0_i32 = arith.constant 0 : i32
    %c0_i32_0 = arith.constant 0 : i32
    return %arg0, %c0_i32 : i32, i32
  }
}

</mosaic_0001>

<llo_original>
// kernel: _lambda_.1
$region0: #{_lambda_.1}
  #allocation0 [shape = 'u32[]', space=smem, size = 0x4, offset = 0x4, fixed_abs, tag = 'smem constant byte address 0x4 - core index']
  #allocation1 [shape = 'u32[144,128]{1,0:T(1,128)}', space=vmem, size = 0x12000, scoped, tag = 'internal scratch']
  %s0 = inlined_call_operand.vmem [shape: f32[16,1], index: 0, kind: input, shape index: {}]
  %s1 = inlined_call_operand.vmem [shape: f32[16,128], index: 1, kind: input, shape index: {}]
  %s2 = inlined_call_operand.vmem [shape: f32[1,128], index: 2, kind: input, shape index: {}]
  %s3 = inlined_call_operand.vmem [shape: f32[1,128], index: 3, kind: input, shape index: {}]
  %s4 = inlined_call_operand.hbm [shape: bf16[128,384], index: 4, kind: input, shape index: {}]
  %s5 = inlined_call_operand.vmem [shape: f32[1,384], index: 5, kind: input, shape index: {}]
  %s6 = inlined_call_operand.hbm [shape: bf16[128,256], index: 6, kind: input, shape index: {}]
  %s7 = inlined_call_operand.hbm [shape: bf16[256,256], index: 7, kind: input, shape index: {}]
  %s8 = inlined_call_operand.vmem [shape: f32[1,256], index: 8, kind: input, shape index: {}]
  %s9 = inlined_call_operand.hbm [shape: bf16[256,256], index: 9, kind: input, shape index: {}]
  %s10 = inlined_call_operand.vmem [shape: f32[1,256], index: 10, kind: input, shape index: {}]
  %s11 = inlined_call_operand.hbm [shape: bf16[256,128], index: 11, kind: input, shape index: {}]
  %s12 = inlined_call_operand.vmem [shape: f32[1,128], index: 12, kind: input, shape index: {}]
  %s13 = inlined_call_operand.vmem [shape: f32[16,128], index: 13, kind: output, shape index: {}]
  %s14 = sld [smem:[#allocation0]]
  $region82: #{_lambda_.1} parent=0
    _
  %s16 = ssub.s32 1, %s14
  %s17 = scalar_select 0, %s16, %s14
  $region1: #{_lambda_.1} parent=0
    #allocation2 [shape = 'u8[98304]{0}', space=vmem, size = 0x18000, scoped, tag = 'input window, operand 4, single buffered']
    #allocation3 [shape = 's32[1]{0}', space=sflag, size = 0x4, scoped, tag = 'scoped memory for _lambda_.1']
    #allocation4 [shape = 'u8[65536]{0}', space=vmem, size = 0x10000, scoped, tag = 'input window, operand 6, single buffered']
    #allocation5 [shape = 's32[1]{0}', space=sflag, size = 0x4, scoped, tag = 'scoped memory for _lambda_.1']
    #allocation6 [shape = 'u8[131072]{0}', space=vmem, size = 0x20000, scoped, tag = 'input window, operand 7, single buffered']
    #allocation7 [shape = 'u8[131072]{0}', space=vmem, size = 0x20000, scoped, tag = 'input window, operand 9, single buffered']
    #allocation8 [shape = 's32[1]{0}', space=sflag, size = 0x4, scoped, tag = 'scoped memory for _lambda_.1']
    #allocation9 [shape = 'u8[65536]{0}', space=vmem, size = 0x10000, scoped, tag = 'input window, operand 11, single buffered']
    %18 = vsyncpa [#allocation3], 0
    %19 = vsyncpa [#allocation5], 0
    %20 = vsyncpa [#allocation8], 0
    // Predicated region
    $region2: #{_lambda_.1} parent=1 // pred_check
      _
    $region3: #{_lambda_.1} parent=1 // pred_check_branch
      %22 = sbr.rel (0) target = $region5
    $region4: #{_lambda_.1} parent=1 // pred_region
      _
    $region5: #{_lambda_.1} parent=1 // pred_fallthru
      _
    // Predicated region
    $region6: #{_lambda_.1} parent=1 // pred_check
      _
    $region7: #{_lambda_.1} parent=1 // pred_check_branch
      %24 = sbr.rel (0) target = $region9
    $region8: #{_lambda_.1} parent=1 // pred_region
      _
    $region9: #{_lambda_.1} parent=1 // pred_fallthru
      _
    // Predicated region
    $region10: #{_lambda_.1} parent=1 // pred_check
      _
    $region11: #{_lambda_.1} parent=1 // pred_check_branch
      %26 = sbr.rel (0) target = $region13
    $region12: #{_lambda_.1} parent=1 // pred_region
      _
    $region13: #{_lambda_.1} parent=1 // pred_fallthru
      _
    // Predicated region
    $region14: #{_lambda_.1} parent=1 // pred_check
      _
    $region15: #{_lambda_.1} parent=1 // pred_check_branch
      %28 = sbr.rel (0) target = $region17
    $region16: #{_lambda_.1} parent=1 // pred_region
      _
    $region17: #{_lambda_.1} parent=1 // pred_fallthru
      _
    // Predicated region
    $region18: #{_lambda_.1} parent=1 // pred_check
      _
    $region19: #{_lambda_.1} parent=1 // pred_check_branch
      %30 = sbr.rel (0) target = $region21
    $region20: #{_lambda_.1} parent=1 // pred_region
      %s32 = ssub.s32 3072, 3072
      %33 = vsyncadd [#allocation3], %s32
      %s34 = sshll.u32 [#allocation2], 4
      %s35 = int_to_ptr.vmem [resolvable:$true] %s34
      %40 = dma.hbm_to_vmem [thread:$0]  %s4, 3072, %s35, [#allocation3], 192, 192, 12
    $region21: #{_lambda_.1} parent=1 // pred_fallthru
      _
    // Predicated region
    $region22: #{_lambda_.1} parent=1 // pred_check
      _
    $region23: #{_lambda_.1} parent=1 // pred_check_branch
      %42 = sbr.rel (0) target = $region25
    $region24: #{_lambda_.1} parent=1 // pred_region
      _
    $region25: #{_lambda_.1} parent=1 // pred_fallthru
      _
    // Predicated region
    $region26: #{_lambda_.1} parent=1 // pred_check
      _
    $region27: #{_lambda_.1} parent=1 // pred_check_branch
      %44 = sbr.rel (0) target = $region29
    $region28: #{_lambda_.1} parent=1 // pred_region
      %s46 = ssub.s32 2048, 2048
      %47 = vsyncadd [#allocation5], %s46
      %s48 = sshll.u32 [#allocation4], 4
      %s49 = int_to_ptr.vmem [resolvable:$true] %s48
      %54 = dma.hbm_to_vmem [thread:$0]  %s6, 2048, %s49, [#allocation5], 128, 128, 8
    $region29: #{_lambda_.1} parent=1 // pred_fallthru
      _
    // Predicated region
    $region30: #{_lambda_.1} parent=1 // pred_check
      _
    $region31: #{_lambda_.1} parent=1 // pred_check_branch
      %56 = sbr.rel (0) target = $region33
    $region32: #{_lambda_.1} parent=1 // pred_region
      %s58 = ssub.s32 4096, 4096
      %59 = vsyncadd [#allocation5], %s58
      %s60 = sshll.u32 [#allocation6], 4
      %s61 = int_to_ptr.vmem [resolvable:$true] %s60
      %66 = dma.hbm_to_vmem [thread:$0]  %s7, 4096, %s61, [#allocation5], 128, 128, 8
    $region33: #{_lambda_.1} parent=1 // pred_fallthru
      _
    // Predicated region
    $region34: #{_lambda_.1} parent=1 // pred_check
      _
    $region35: #{_lambda_.1} parent=1 // pred_check_branch
      %68 = sbr.rel (0) target = $region37
    $region36: #{_lambda_.1} parent=1 // pred_region
      _
    $region37: #{_lambda_.1} parent=1 // pred_fallthru
      _
    // Predicated region
    $region38: #{_lambda_.1} parent=1 // pred_check
      _
    $region39: #{_lambda_.1} parent=1 // pred_check_branch
      %70 = sbr.rel (0) target = $region41
    $region40: #{_lambda_.1} parent=1 // pred_region
      %s72 = ssub.s32 4096, 4096
      %73 = vsyncadd [#allocation8], %s72
      %s74 = sshll.u32 [#allocation7], 4
      %s75 = int_to_ptr.vmem [resolvable:$true] %s74
      %80 = dma.hbm_to_vmem [thread:$0]  %s9, 4096, %s75, [#allocation8], 128, 128, 8
    $region41: #{_lambda_.1} parent=1 // pred_fallthru
      _
    // Predicated region
    $region42: #{_lambda_.1} parent=1 // pred_check
      _
    $region43: #{_lambda_.1} parent=1 // pred_check_branch
      %82 = sbr.rel (0) target = $region45
    $region44: #{_lambda_.1} parent=1 // pred_region
      _
    $region45: #{_lambda_.1} parent=1 // pred_fallthru
      _
    // Predicated region
    $region46: #{_lambda_.1} parent=1 // pred_check
      _
    $region47: #{_lambda_.1} parent=1 // pred_check_branch
      %84 = sbr.rel (0) target = $region49
    $region48: #{_lambda_.1} parent=1 // pred_region
      %s86 = ssub.s32 2048, 2048
      %87 = vsyncadd [#allocation8], %s86
      %s88 = sshll.u32 [#allocation9], 4
      %s89 = int_to_ptr.vmem [resolvable:$true] %s88
      %94 = dma.hbm_to_vmem [thread:$0]  %s11, 2048, %s89, [#allocation8], 64, 64, 4
    $region49: #{_lambda_.1} parent=1 // pred_fallthru
      _
    // Predicated region
    $region50: #{_lambda_.1} parent=1 // pred_check
      _
    $region51: #{_lambda_.1} parent=1 // pred_check_branch
      %96 = sbr.rel (0) target = $region53
    $region52: #{_lambda_.1} parent=1 // pred_region
      _
    $region53: #{_lambda_.1} parent=1 // pred_fallthru
      _
    // Predicated region
    $region54: #{_lambda_.1} parent=1 // pred_check
      _
    $region55: #{_lambda_.1} parent=1 // pred_check_branch
      %98 = sbr.rel (0) target = $region57
    $region56: #{_lambda_.1} parent=1 // pred_region
      %99 = dma.done [#allocation3], 3072
    $region57: #{_lambda_.1} parent=1 // pred_fallthru
      _
    // Predicated region
    $region58: #{_lambda_.1} parent=1 // pred_check
      _
    $region59: #{_lambda_.1} parent=1 // pred_check_branch
      %101 = sbr.rel (0) target = $region61
    $region60: #{_lambda_.1} parent=1 // pred_region
      %102 = dma.done [#allocation5], 2048
    $region61: #{_lambda_.1} parent=1 // pred_fallthru
      _
    // Predicated region
    $region62: #{_lambda_.1} parent=1 // pred_check
      _
    $region63: #{_lambda_.1} parent=1 // pred_check_branch
      %104 = sbr.rel (0) target = $region65
    $region64: #{_lambda_.1} parent=1 // pred_region
      %105 = dma.done [#allocation5], 4096
    $region65: #{_lambda_.1} parent=1 // pred_fallthru
      _
    // Predicated region
    $region66: #{_lambda_.1} parent=1 // pred_check
      _
    $region67: #{_lambda_.1} parent=1 // pred_check_branch
      %107 = sbr.rel (0) target = $region69
    $region68: #{_lambda_.1} parent=1 // pred_region
      %108 = dma.done [#allocation8], 4096
    $region69: #{_lambda_.1} parent=1 // pred_fallthru
      _
    // Predicated region
    $region70: #{_lambda_.1} parent=1 // pred_check
      _
    $region71: #{_lambda_.1} parent=1 // pred_check_branch
      %110 = sbr.rel (0) target = $region73
    $region72: #{_lambda_.1} parent=1 // pred_region
      %111 = dma.done [#allocation8], 2048
    $region73: #{_lambda_.1} parent=1 // pred_fallthru
      _
    %v113 = vld [vmem:[%s0] sm:$0xff]
    %v114 = vld [vmem:[%s0 + $0x8] sm:$0xff]
    %v115 = vld [vmem:[%s2] sm:$0x1]
    %117 = vset.pattern.permute.xlu0 0
    %118 = vperm.xlu0 %117, %v113
    %v119 = vpop.permute.xlu0 %118
    %122 = vset.pattern.permute.xlu0 0
    %123 = vperm.xlu0 %122, %v114
    %v124 = vpop.permute.xlu0 %123
    %v127 = vlaneseq
    %v128 = vshrl.u32 %v127, 7
    %v129 = vsub.s32 0, %v128
    %v130 = vrot.slane %v115, %v129
    %v132 = vmul.f32 %v119, %v130
    %v133 = vmul.f32 %v124, %v130
    %v134 = vld [vmem:[%s3] sm:$0x1]
    %v136 = vlaneseq
    %v137 = vshrl.u32 %v136, 7
    %v138 = vsub.s32 0, %v137
    %v139 = vrot.slane %v134, %v138
    %v141 = vadd.f32 %v132, %v139
    %v142 = vadd.f32 %v133, %v139
    %v143 = vld [vmem:[%s1] sm:$0xff]
    %v144 = vld [vmem:[%s1 + $0x8] sm:$0xff]
    %v145 = vand.u32 2147483647, %v141
    %vm146 = vcmp.le.f32.partialorder %v145, 0.7853982
    %vm147 = vcmp.lt.s32.totalorder %v141, 0
    %v148 = vand.u32 %v141, 2139095040
    %v149 = vshrl.u32 %v148, 23
    %v150 = vsub.s32 %v149, 127
    %v151 = vand.u32 2147483647, %v141
    %v152 = vand.u32 %v151, 8388607
    %v153 = vor.u32 %v152, 8388608
    %v154 = vsub.s32 0, %v153
    %v155 = vadd.s32 %v150, 1
    %vm156 = vcmp.gt.s32.totalorder %v155, 0
    %v157 = vsel %vm156, %v155, 0
    %v158 = vshrl.u32 %v157, 5
    %v159 = vand.u32 %v157, 31
    %v160 = vsub.s32 32, %v159
    %v161 = vshrl.u32 683565275, %v160
    %v162 = vshll.u32 683565275, %v159
    %v163 = vshrl.u32 2475754826, %v160
    %v164 = vor.u32 %v162, %v163
    %v165 = vshll.u32 2475754826, %v159
    %v166 = vshrl.u32 2131351028, %v160
    %v167 = vor.u32 %v165, %v166
    %v168 = vshll.u32 2131351028, %v159
    %v169 = vshrl.u32 2102212464, %v160
    %v170 = vor.u32 %v168, %v169
    %v171 = vshll.u32 2102212464, %v159
    %v172 = vshrl.u32 920167782, %v160
    %v173 = vor.u32 %v171, %v172
    %v174 = vshll.u32 920167782, %v159
    %v175 = vshrl.u32 1326507024, %v160
    %v176 = vor.u32 %v174, %v175
    %vm177 = vcmp.lt.s32.totalorder %v158, 1
    %vm178 = vcmp.lt.s32.totalorder %v158, 2
    %vm179 = vcmp.lt.s32.totalorder %v158, 3
    %vm180 = vcmp.lt.s32.totalorder %v158, 4
    %v181 = vsel %vm177, %v161, %v164
    %v182 = vsel %vm180, %v170, 2102212464
    %v183 = vsel %vm179, %v167, %v182
    %v184 = vsel %vm178, %v181, %v183
    %v185 = vsel %vm177, %v164, %v167
    %v186 = vsel %vm180, %v173, 920167782
    %v187 = vsel %vm179, %v170, %v186
    %v188 = vsel %vm178, %v185, %v187
    %v189 = vsel %vm177, %v167, %v170
    %v190 = vsel %vm180, %v176, 1326507024
    %v191 = vsel %vm179, %v173, %v190
    %v192 = vsel %vm178, %v189, %v191
    %v193 = vshll.u32 %v153, 8
    %v194 = vmul.u32.u64.compose %v193, %v192
    %v195 = vextract.low.u32 %v194
    %v196 = vextract.high.u32 %v194
    %v197 = vmul.u32.u64.compose %v193, %v188
    %v198 = vextract.low.u32 %v197
    %v199 = vextract.high.u32 %v197
    %v200 = vmul.u32 %v193, %v184
    %v201 = vadd.s32 %v196, %v198
    %vm202 = vc.u32 %v196, %v198
    %v203 = vadd.s32 %v199, 1
    %v204 = vsel %vm202, %v203, %v199
    %v205 = vadd.s32 %v200, %v204
    %v206 = vadd.s32 %v205, 536870912
    %v207 = vshrl.u32 %v206, 30
    %v208 = vshll.u32 %v207, 30
    %v209 = vsub.s32 %v205, %v208
    %vm210 = vcmp.lt.s32.totalorder %v209, 0
    %v211 = vsub.s32 0, %v209
    %v212 = vsel %vm210, %v211, %v209
    %v213 = vclz %v212
    %v214 = vsub.s32 %v213, 2
    %vm215 = vcmp.gt.s32.totalorder 0, %v214
    %v216 = vsel %vm215, 0, %v214
    %v217 = vsub.s32 32, %v216
    %v218 = vshll.u32 %v209, %v216
    %v219 = vshrl.u32 %v201, %v217
    %v220 = vor.u32 %v218, %v219
    %v221 = vsub.s32 4294967266, %v216
    %v222 = vadd.s32 %v221, 127
    %v223 = vshll.u32 %v222, 23
    %v224 = vor.u32 4788187, %v223
    %v225 = vand.u32 2147483647, %v224
    %v227 = vcvt.s32.f32 %v220
    %v228 = vmul.f32 %v227, %v225
    %v229 = vxor.u32 %v228, 2147483648
    %v230 = vsel %vm147, %v229, %v228
    %v231 = vsub.s32 4, %v207
    %v232 = vsel %vm147, %v231, %v207
    %v233 = vsel %vm146, %v141, %v230
    %v234 = vsel %vm146, 0, %v232
    %v235 = vcosq.f32.pop %v233
    %v236 = vsinq.f32.pop %v233
    %vm237 = vweird.f32 %v141
    %v238 = vadd.s32 %v234, 3
    %v239 = vand.u32 %v238, 3
    %vm240 = vcmp.lt.s32.totalorder %v239, 2
    %vm241 = vcmp.eq.s32.totalorder %v239, 0
    %v242 = vxor.u32 %v236, 2147483648
    %v243 = vsel %vm241, %v235, %v242
    %vm244 = vcmp.eq.s32.totalorder %v239, 2
    %v245 = vxor.u32 %v235, 2147483648
    %v246 = vsel %vm244, %v245, %v236
    %v247 = vsel %vm240, %v243, %v246
    %v248 = vsel %vm237, nan, %v247
    %v249 = vand.u32 2147483647, %v142
    %vm250 = vcmp.le.f32.partialorder %v249, 0.7853982
    %vm251 = vcmp.lt.s32.totalorder %v142, 0
    %v252 = vand.u32 %v142, 2139095040
    %v253 = vshrl.u32 %v252, 23
    %v254 = vsub.s32 %v253, 127
    %v255 = vand.u32 2147483647, %v142
    %v256 = vand.u32 %v255, 8388607
    %v257 = vor.u32 %v256, 8388608
    %v258 = vsub.s32 0, %v257
    %v259 = vadd.s32 %v254, 1
    %vm260 = vcmp.gt.s32.totalorder %v259, 0
    %v261 = vsel %vm260, %v259, 0
    %v262 = vshrl.u32 %v261, 5
    %v263 = vand.u32 %v261, 31
    %v264 = vsub.s32 32, %v263
    %v265 = vshrl.u32 683565275, %v264
    %v266 = vshll.u32 683565275, %v263
    %v267 = vshrl.u32 2475754826, %v264
    %v268 = vor.u32 %v266, %v267
    %v269 = vshll.u32 2475754826, %v263
    %v270 = vshrl.u32 2131351028, %v264
    %v271 = vor.u32 %v269, %v270
    %v272 = vshll.u32 2131351028, %v263
    %v273 = vshrl.u32 2102212464, %v264
    %v274 = vor.u32 %v272, %v273
    %v275 = vshll.u32 2102212464, %v263
    %v276 = vshrl.u32 920167782, %v264
    %v277 = vor.u32 %v275, %v276
    %v278 = vshll.u32 920167782, %v263
    %v279 = vshrl.u32 1326507024, %v264
    %v280 = vor.u32 %v278, %v279
    %vm281 = vcmp.lt.s32.totalorder %v262, 1
    %vm282 = vcmp.lt.s32.totalorder %v262, 2
    %vm283 = vcmp.lt.s32.totalorder %v262, 3
    %vm284 = vcmp.lt.s32.totalorder %v262, 4
    %v285 = vsel %vm281, %v265, %v268
    %v286 = vsel %vm284, %v274, 2102212464
    %v287 = vsel %vm283, %v271, %v286
    %v288 = vsel %vm282, %v285, %v287
    %v289 = vsel %vm281, %v268, %v271
    %v290 = vsel %vm284, %v277, 920167782
    %v291 = vsel %vm283, %v274, %v290
    %v292 = vsel %vm282, %v289, %v291
    %v293 = vsel %vm281, %v271, %v274
    %v294 = vsel %vm284, %v280, 1326507024
    %v295 = vsel %vm283, %v277, %v294
    %v296 = vsel %vm282, %v293, %v295
    %v297 = vshll.u32 %v257, 8
    %v298 = vmul.u32.u64.compose %v297, %v296
    %v299 = vextract.low.u32 %v298
    %v300 = vextract.high.u32 %v298
    %v301 = vmul.u32.u64.compose %v297, %v292
    %v302 = vextract.low.u32 %v301
    %v303 = vextract.high.u32 %v301
    %v304 = vmul.u32 %v297, %v288
    %v305 = vadd.s32 %v300, %v302
    %vm306 = vc.u32 %v300, %v302
    %v307 = vadd.s32 %v303, 1
    %v308 = vsel %vm306, %v307, %v303
    %v309 = vadd.s32 %v304, %v308
    %v310 = vadd.s32 %v309, 536870912
    %v311 = vshrl.u32 %v310, 30
    %v312 = vshll.u32 %v311, 30
    %v313 = vsub.s32 %v309, %v312
    %vm314 = vcmp.lt.s32.totalorder %v313, 0
    %v315 = vsub.s32 0, %v313
    %v316 = vsel %vm314, %v315, %v313
    %v317 = vclz %v316
    %v318 = vsub.s32 %v317, 2
    %vm319 = vcmp.gt.s32.totalorder 0, %v318
    %v320 = vsel %vm319, 0, %v318
    %v321 = vsub.s32 32, %v320
    %v322 = vshll.u32 %v313, %v320
    %v323 = vshrl.u32 %v305, %v321
    %v324 = vor.u32 %v322, %v323
    %v325 = vsub.s32 4294967266, %v320
    %v326 = vadd.s32 %v325, 127
    %v327 = vshll.u32 %v326, 23
    %v328 = vor.u32 4788187, %v327
    %v329 = vand.u32 2147483647, %v328
    %v331 = vcvt.s32.f32 %v324
    %v332 = vmul.f32 %v331, %v329
    %v333 = vxor.u32 %v332, 2147483648
    %v334 = vsel %vm251, %v333, %v332
    %v335 = vsub.s32 4, %v311
    %v336 = vsel %vm251, %v335, %v311
    %v337 = vsel %vm250, %v142, %v334
    %v338 = vsel %vm250, 0, %v336
    %v339 = vcosq.f32.pop %v337
    %v340 = vsinq.f32.pop %v337
    %vm341 = vweird.f32 %v142
    %v342 = vadd.s32 %v338, 3
    %v343 = vand.u32 %v342, 3
    %vm344 = vcmp.lt.s32.totalorder %v343, 2
    %vm345 = vcmp.eq.s32.totalorder %v343, 0
    %v346 = vxor.u32 %v340, 2147483648
    %v347 = vsel %vm345, %v339, %v346
    %vm348 = vcmp.eq.s32.totalorder %v343, 2
    %v349 = vxor.u32 %v339, 2147483648
    %v350 = vsel %vm348, %v349, %v340
    %v351 = vsel %vm344, %v347, %v350
    %v352 = vsel %vm341, nan, %v351
    %v353 = vadd.f32 %v143, %v248
    %v354 = vadd.f32 %v144, %v352
    %v355 = vpack.c.bf16 %v354, %v353
    %v356 = vld [vmem:[#allocation2] sm:$0xff]
    %v357 = vld [vmem:[#allocation2 + $0x8] sm:$0xf]
    %v358 = vld [vmem:[#allocation2 + $0xc] sm:$0xff]
    %v359 = vld [vmem:[#allocation2 + $0x14] sm:$0xf]
    %v360 = vld [vmem:[#allocation2 + $0x18] sm:$0xff]
    %v361 = vld [vmem:[#allocation2 + $0x20] sm:$0xf]
    %v362 = vld [vmem:[#allocation2 + $0x24] sm:$0xff]
    %v363 = vld [vmem:[#allocation2 + $0x2c] sm:$0xf]
    %v364 = vld [vmem:[#allocation2 + $0x30] sm:$0xff]
    %v365 = vld [vmem:[#allocation2 + $0x38] sm:$0xf]
    %v366 = vld [vmem:[#allocation2 + $0x3c] sm:$0xff]
    %v367 = vld [vmem:[#allocation2 + $0x44] sm:$0xf]
    %v368 = vld [vmem:[#allocation2 + $0x48] sm:$0xff]
    %v369 = vld [vmem:[#allocation2 + $0x50] sm:$0xf]
    %v370 = vld [vmem:[#allocation2 + $0x54] sm:$0xff]
    %v371 = vld [vmem:[#allocation2 + $0x5c] sm:$0xf]
    %v372 = vld [vmem:[#allocation2 + $0x60] sm:$0xff]
    %v373 = vld [vmem:[#allocation2 + $0x68] sm:$0xf]
    %v374 = vld [vmem:[#allocation2 + $0x6c] sm:$0xff]
    %v375 = vld [vmem:[#allocation2 + $0x74] sm:$0xf]
    %v376 = vld [vmem:[#allocation2 + $0x78] sm:$0xff]
    %v377 = vld [vmem:[#allocation2 + $0x80] sm:$0xf]
    %v378 = vld [vmem:[#allocation2 + $0x84] sm:$0xff]
    %v379 = vld [vmem:[#allocation2 + $0x8c] sm:$0xf]
    %v380 = vld [vmem:[#allocation2 + $0x90] sm:$0xff]
    %v381 = vld [vmem:[#allocation2 + $0x98] sm:$0xf]
    %v382 = vld [vmem:[#allocation2 + $0x9c] sm:$0xff]
    %v383 = vld [vmem:[#allocation2 + $0xa4] sm:$0xf]
    %v384 = vld [vmem:[#allocation2 + $0xa8] sm:$0xff]
    %v385 = vld [vmem:[#allocation2 + $0xb0] sm:$0xf]
    %v386 = vld [vmem:[#allocation2 + $0xb4] sm:$0xff]
    %v387 = vld [vmem:[#allocation2 + $0xbc] sm:$0xf]
    %v388 = vld [vmem:[%s5] sm:$0x7]
    %v390 = vlaneseq
    %v391 = vshrl.u32 %v390, 7
    %v392 = vsub.s32 0, %v391
    %v393 = vrot.slane %v388, %v392
    %v394 = vlaneseq
    %v395 = vshrl.u32 %v394, 7
    %v396 = vsub.s32 1, %v395
    %v397 = vrot.slane %v388, %v396
    %v398 = vlaneseq
    %v399 = vshrl.u32 %v398, 7
    %v400 = vsub.s32 2, %v399
    %v401 = vrot.slane %v388, %v400
    %v437 = vunpack.c.l.b16 %v356
    %v438 = vunpack.c.h.b16 %v356
    %v439 = vunpack.c.l.b16 %v357
    %v440 = vunpack.c.l.b16 %v358
    %v441 = vunpack.c.h.b16 %v358
    %v442 = vunpack.c.l.b16 %v359
    %v443 = vunpack.c.l.b16 %v360
    %v444 = vunpack.c.h.b16 %v360
    %v445 = vunpack.c.l.b16 %v361
    %v446 = vunpack.c.l.b16 %v362
    %v447 = vunpack.c.h.b16 %v362
    %v448 = vunpack.c.l.b16 %v363
    %v449 = vunpack.c.l.b16 %v364
    %v450 = vunpack.c.h.b16 %v364
    %v451 = vunpack.c.l.b16 %v365
    %v452 = vunpack.c.l.b16 %v366
    %v453 = vunpack.c.h.b16 %v366
    %v454 = vunpack.c.l.b16 %v367
    %v455 = vunpack.c.l.b16 %v368
    %v456 = vunpack.c.h.b16 %v368
    %v457 = vunpack.c.l.b16 %v369
    %v458 = vunpack.c.l.b16 %v370
    %v459 = vunpack.c.h.b16 %v370
    %v460 = vunpack.c.l.b16 %v371
    %v461 = vunpack.c.l.b16 %v372
    %v462 = vunpack.c.h.b16 %v372
    %v463 = vunpack.c.l.b16 %v373
    %v464 = vunpack.c.l.b16 %v374
    %v465 = vunpack.c.h.b16 %v374
    %v466 = vunpack.c.l.b16 %v375
    %v467 = vunpack.c.l.b16 %v376
    %v468 = vunpack.c.h.b16 %v376
    %v469 = vunpack.c.l.b16 %v377
    %v470 = vunpack.c.l.b16 %v378
    %v471 = vunpack.c.h.b16 %v378
    %v472 = vunpack.c.l.b16 %v379
    %v473 = vunpack.c.l.b16 %v380
    %v474 = vunpack.c.h.b16 %v380
    %v475 = vunpack.c.l.b16 %v381
    %v476 = vunpack.c.l.b16 %v382
    %v477 = vunpack.c.h.b16 %v382
    %v478 = vunpack.c.l.b16 %v383
    %v479 = vunpack.c.l.b16 %v384
    %v480 = vunpack.c.h.b16 %v384
    %v481 = vunpack.c.l.b16 %v385
    %v482 = vunpack.c.l.b16 %v386
    %v483 = vunpack.c.h.b16 %v386
    %v484 = vunpack.c.l.b16 %v387
    %v485 = vpack.c.b16 %v440, %v437
    %v486 = vpack.c.b16 %v441, %v438
    %v487 = vpack.c.b16 %v442, %v439
    %v488 = vpack.c.b16 %v446, %v443
    %v489 = vpack.c.b16 %v447, %v444
    %v490 = vpack.c.b16 %v448, %v445
    %v491 = vpack.c.b16 %v452, %v449
    %v492 = vpack.c.b16 %v453, %v450
    %v493 = vpack.c.b16 %v454, %v451
    %v494 = vpack.c.b16 %v458, %v455
    %v495 = vpack.c.b16 %v459, %v456
    %v496 = vpack.c.b16 %v460, %v457
    %v497 = vpack.c.b16 %v464, %v461
    %v498 = vpack.c.b16 %v465, %v462
    %v499 = vpack.c.b16 %v466, %v463
    %v500 = vpack.c.b16 %v470, %v467
    %v501 = vpack.c.b16 %v471, %v468
    %v502 = vpack.c.b16 %v472, %v469
    %v503 = vpack.c.b16 %v476, %v473
    %v504 = vpack.c.b16 %v477, %v474
    %v505 = vpack.c.b16 %v478, %v475
    %v506 = vpack.c.b16 %v482, %v479
    %v507 = vpack.c.b16 %v483, %v480
    %v508 = vpack.c.b16 %v484, %v481
    %533 = vmatprep.subr.bf16.mxu0 %v507
    %534 = vmatpush1.bf16.msra.mxu0 %v506
    %535 = vmatprep.subr.bf16.mxu0 %v504
    %536 = vmatpush1.bf16.msra.mxu0 %v503
    %537 = vmatprep.subr.bf16.mxu0 %v501
    %538 = vmatpush1.bf16.msra.mxu0 %v500
    %539 = vmatprep.subr.bf16.mxu0 %v498
    %540 = vmatpush1.bf16.msra.mxu0 %v497
    %541 = vmatprep.subr.bf16.mxu0 %v495
    %542 = vmatpush1.bf16.msra.mxu0 %v494
    %543 = vmatprep.subr.bf16.mxu0 %v492
    %544 = vmatpush1.bf16.msra.mxu0 %v491
    %545 = vmatprep.subr.bf16.mxu0 %v489
    %546 = vmatpush1.bf16.msra.mxu0 %v488
    %547 = vmatprep.subr.bf16.mxu0 %v486
    %548 = vmatpush1.bf16.msra.mxu0 %v485
    %549 = vmatprep.subr.bf16.mxu0 0
    %550 = vmatpush2.bf16.msra.mxu0 0
    %551 = vmatprep.subr.bf16.mxu0 0
    %552 = vmatpush2.bf16.msra.mxu0 0
    %553 = vmatprep.subr.bf16.mxu0 0
    %554 = vmatpush2.bf16.msra.mxu0 0
    %555 = vmatprep.subr.bf16.mxu0 0
    %556 = vmatpush2.bf16.msra.mxu0 0
    %557 = vmatprep.subr.bf16.mxu0 0
    %558 = vmatpush2.bf16.msra.mxu0 0
    %559 = vmatprep.subr.bf16.mxu0 0
    %560 = vmatpush2.bf16.msra.mxu0 0
    %561 = vmatprep.subr.bf16.mxu0 0
    %562 = vmatpush2.bf16.msra.mxu0 0
    %563 = vmatprep.subr.bf16.mxu0 0
    %564 = vmatpush2.bf16.msra.mxu0 0
    %565 = vmatprep.mubr.bf16.mxu0 0
    %566 = vmatmul.mubr.bf16.gmra.mxu0 %v355
    %v567 = vpop.f32.mrf.mxu0
    %v568 = vadd.f32 %v393, %v567
    %v569 = vpop.f32.mrf.mxu0
    %v570 = vadd.f32 %v397, %v569
    %v571 = vpop.f32.mrf.mxu0
    %v572 = vadd.f32 %v393, %v571
    %v573 = vpop.f32.mrf.mxu0
    %v574 = vadd.f32 %v397, %v573
    %575 = vdwg.mxu0
    %576 = vmatprep.subr.bf16.mxu0 0
    %577 = vmatpush1.bf16.msra.mxu0 %v508
    %578 = vmatprep.subr.bf16.mxu0 0
    %579 = vmatpush1.bf16.msra.mxu0 %v505
    %580 = vmatprep.subr.bf16.mxu0 0
    %581 = vmatpush1.bf16.msra.mxu0 %v502
    %582 = vmatprep.subr.bf16.mxu0 0
    %583 = vmatpush1.bf16.msra.mxu0 %v499
    %584 = vmatprep.subr.bf16.mxu0 0
    %585 = vmatpush1.bf16.msra.mxu0 %v496
    %586 = vmatprep.subr.bf16.mxu0 0
    %587 = vmatpush1.bf16.msra.mxu0 %v493
    %588 = vmatprep.subr.bf16.mxu0 0
    %589 = vmatpush1.bf16.msra.mxu0 %v490
    %590 = vmatprep.subr.bf16.mxu0 0
    %591 = vmatpush1.bf16.msra.mxu0 %v487
    %592 = vmatprep.subr.bf16.mxu0 0
    %593 = vmatpush2.bf16.msra.mxu0 0
    %594 = vmatprep.subr.bf16.mxu0 0
    %595 = vmatpush2.bf16.msra.mxu0 0
    %596 = vmatprep.subr.bf16.mxu0 0
    %597 = vmatpush2.bf16.msra.mxu0 0
    %598 = vmatprep.subr.bf16.mxu0 0
    %599 = vmatpush2.bf16.msra.mxu0 0
    %600 = vmatprep.subr.bf16.mxu0 0
    %601 = vmatpush2.bf16.msra.mxu0 0
    %602 = vmatprep.subr.bf16.mxu0 0
    %603 = vmatpush2.bf16.msra.mxu0 0
    %604 = vmatprep.subr.bf16.mxu0 0
    %605 = vmatpush2.bf16.msra.mxu0 0
    %606 = vmatprep.subr.bf16.mxu0 0
    %607 = vmatpush2.bf16.msra.mxu0 0
    %608 = vmatprep.mubr.bf16.mxu0 0
    %609 = vmatmul.mubr.bf16.gmra.mxu0 %v355
    %v610 = vpop.f32.mrf.mxu0
    %v611 = vadd.f32 %v401, %v610
    %v612 = vpop.f32.mrf.mxu0
    %v613 = vpop.f32.mrf.mxu0
    %v614 = vadd.f32 %v401, %v613
    %v615 = vpop.f32.mrf.mxu0
    %616 = vdwg.mxu0
    %v617 = vmin.f32 %v568, 20.0
    %v618 = vmin.f32 %v572, 20.0
    %v619 = vmul.f32 %v617, 1.442695
    %v620 = vpow.pop %v619
    %v621 = vmul.f32 %v618, 1.442695
    %v622 = vpow.pop %v621
    %v623 = vadd.f32 %v620, 1.0
    %v624 = vadd.f32 %v622, 1.0
    %v625 = vmul.f32 %v623, %v623
    %v626 = vmul.f32 %v624, %v624
    %v627 = vsub.f32 %v625, 1.0
    %v628 = vsub.f32 %v626, 1.0
    %v629 = vmul.f32 %v568, %v627
    %v630 = vmul.f32 %v572, %v628
    %v631 = vadd.f32 %v625, 1.0
    %v632 = vadd.f32 %v626, 1.0
    %v633 = vrcp.pop %v631
    %v634 = vrcp.pop %v632
    %v635 = vmul.f32 %v629, %v633
    %v636 = vmul.f32 %v630, %v634
    %v637 = vpack.c.bf16 %v636, %v635
    %v638 = vld [vmem:[#allocation4] sm:$0xff]
    %v639 = vld [vmem:[#allocation4 + $0x8] sm:$0xff]
    %v640 = vld [vmem:[#allocation4 + $0x10] sm:$0xff]
    %v641 = vld [vmem:[#allocation4 + $0x18] sm:$0xff]
    %v642 = vld [vmem:[#allocation4 + $0x20] sm:$0xff]
    %v643 = vld [vmem:[#allocation4 + $0x28] sm:$0xff]
    %v644 = vld [vmem:[#allocation4 + $0x30] sm:$0xff]
    %v645 = vld [vmem:[#allocation4 + $0x38] sm:$0xff]
    %v646 = vld [vmem:[#allocation4 + $0x40] sm:$0xff]
    %v647 = vld [vmem:[#allocation4 + $0x48] sm:$0xff]
    %v648 = vld [vmem:[#allocation4 + $0x50] sm:$0xff]
    %v649 = vld [vmem:[#allocation4 + $0x58] sm:$0xff]
    %v650 = vld [vmem:[#allocation4 + $0x60] sm:$0xff]
    %v651 = vld [vmem:[#allocation4 + $0x68] sm:$0xff]
    %v652 = vld [vmem:[#allocation4 + $0x70] sm:$0xff]
    %v653 = vld [vmem:[#allocation4 + $0x78] sm:$0xff]
    %v670 = vunpack.c.l.b16 %v638
    %v671 = vunpack.c.h.b16 %v638
    %v672 = vunpack.c.l.b16 %v639
    %v673 = vunpack.c.h.b16 %v639
    %v674 = vunpack.c.l.b16 %v640
    %v675 = vunpack.c.h.b16 %v640
    %v676 = vunpack.c.l.b16 %v641
    %v677 = vunpack.c.h.b16 %v641
    %v678 = vunpack.c.l.b16 %v642
    %v679 = vunpack.c.h.b16 %v642
    %v680 = vunpack.c.l.b16 %v643
    %v681 = vunpack.c.h.b16 %v643
    %v682 = vunpack.c.l.b16 %v644
    %v683 = vunpack.c.h.b16 %v644
    %v684 = vunpack.c.l.b16 %v645
    %v685 = vunpack.c.h.b16 %v645
    %v686 = vunpack.c.l.b16 %v646
    %v687 = vunpack.c.h.b16 %v646
    %v688 = vunpack.c.l.b16 %v647
    %v689 = vunpack.c.h.b16 %v647
    %v690 = vunpack.c.l.b16 %v648
    %v691 = vunpack.c.h.b16 %v648
    %v692 = vunpack.c.l.b16 %v649
    %v693 = vunpack.c.h.b16 %v649
    %v694 = vunpack.c.l.b16 %v650
    %v695 = vunpack.c.h.b16 %v650
    %v696 = vunpack.c.l.b16 %v651
    %v697 = vunpack.c.h.b16 %v651
    %v698 = vunpack.c.l.b16 %v652
    %v699 = vunpack.c.h.b16 %v652
    %v700 = vunpack.c.l.b16 %v653
    %v701 = vunpack.c.h.b16 %v653
    %v702 = vpack.c.b16 %v672, %v670
    %v703 = vpack.c.b16 %v673, %v671
    %v704 = vpack.c.b16 %v676, %v674
    %v705 = vpack.c.b16 %v677, %v675
    %v706 = vpack.c.b16 %v680, %v678
    %v707 = vpack.c.b16 %v681, %v679
    %v708 = vpack.c.b16 %v684, %v682
    %v709 = vpack.c.b16 %v685, %v683
    %v710 = vpack.c.b16 %v688, %v686
    %v711 = vpack.c.b16 %v689, %v687
    %v712 = vpack.c.b16 %v692, %v690
    %v713 = vpack.c.b16 %v693, %v691
    %v714 = vpack.c.b16 %v696, %v694
    %v715 = vpack.c.b16 %v697, %v695
    %v716 = vpack.c.b16 %v700, %v698
    %v717 = vpack.c.b16 %v701, %v699
    %734 = vmatprep.subr.bf16.mxu0 %v717
    %735 = vmatpush1.bf16.msra.mxu0 %v716
    %736 = vmatprep.subr.bf16.mxu0 %v715
    %737 = vmatpush1.bf16.msra.mxu0 %v714
    %738 = vmatprep.subr.bf16.mxu0 %v713
    %739 = vmatpush1.bf16.msra.mxu0 %v712
    %740 = vmatprep.subr.bf16.mxu0 %v711
    %741 = vmatpush1.bf16.msra.mxu0 %v710
    %742 = vmatprep.subr.bf16.mxu0 %v709
    %743 = vmatpush1.bf16.msra.mxu0 %v708
    %744 = vmatprep.subr.bf16.mxu0 %v707
    %745 = vmatpush1.bf16.msra.mxu0 %v706
    %746 = vmatprep.subr.bf16.mxu0 %v705
    %747 = vmatpush1.bf16.msra.mxu0 %v704
    %748 = vmatprep.subr.bf16.mxu0 %v703
    %749 = vmatpush1.bf16.msra.mxu0 %v702
    %750 = vmatprep.subr.bf16.mxu0 0
    %751 = vmatpush2.bf16.msra.mxu0 0
    %752 = vmatprep.subr.bf16.mxu0 0
    %753 = vmatpush2.bf16.msra.mxu0 0
    %754 = vmatprep.subr.bf16.mxu0 0
    %755 = vmatpush2.bf16.msra.mxu0 0
    %756 = vmatprep.subr.bf16.mxu0 0
    %757 = vmatpush2.bf16.msra.mxu0 0
    %758 = vmatprep.subr.bf16.mxu0 0
    %759 = vmatpush2.bf16.msra.mxu0 0
    %760 = vmatprep.subr.bf16.mxu0 0
    %761 = vmatpush2.bf16.msra.mxu0 0
    %762 = vmatprep.subr.bf16.mxu0 0
    %763 = vmatpush2.bf16.msra.mxu0 0
    %764 = vmatprep.subr.bf16.mxu0 0
    %765 = vmatpush2.bf16.msra.mxu0 0
    %766 = vmatprep.mubr.bf16.mxu0 0
    %767 = vmatmul.mubr.bf16.gmra.mxu0 %v637
    %v768 = vpop.f32.mrf.mxu0
    %v769 = vadd.f32 0.0, %v768
    %v770 = vpop.f32.mrf.mxu0
    %v771 = vadd.f32 0.0, %v770
    %v772 = vpop.f32.mrf.mxu0
    %v773 = vadd.f32 0.0, %v772
    %v774 = vpop.f32.mrf.mxu0
    %v775 = vadd.f32 0.0, %v774
    %776 = vdwg.mxu0
    %v777 = vadd.f32 %v570, %v769
    %v778 = vadd.f32 %v611, %v771
    %v779 = vadd.f32 %v574, %v773
    %v780 = vadd.f32 %v614, %v775
    %v781 = vmin.f32 %v777, 20.0
    %v782 = vmin.f32 %v778, 20.0
    %v783 = vmin.f32 %v779, 20.0
    %v784 = vmin.f32 %v780, 20.0
    %v785 = vmul.f32 %v781, 1.442695
    %v786 = vpow.pop %v785
    %v787 = vmul.f32 %v782, 1.442695
    %v788 = vpow.pop %v787
    %v789 = vmul.f32 %v783, 1.442695
    %v790 = vpow.pop %v789
    %v791 = vmul.f32 %v784, 1.442695
    %v792 = vpow.pop %v791
    %v793 = vadd.f32 %v786, 1.0
    %v794 = vadd.f32 %v788, 1.0
    %v795 = vadd.f32 %v790, 1.0
    %v796 = vadd.f32 %v792, 1.0
    %v797 = vmul.f32 %v793, %v793
    %v798 = vmul.f32 %v794, %v794
    %v799 = vmul.f32 %v795, %v795
    %v800 = vmul.f32 %v796, %v796
    %v801 = vsub.f32 %v797, 1.0
    %v802 = vsub.f32 %v798, 1.0
    %v803 = vsub.f32 %v799, 1.0
    %v804 = vsub.f32 %v800, 1.0
    %v805 = vmul.f32 %v777, %v801
    %v806 = vmul.f32 %v778, %v802
    %v807 = vmul.f32 %v779, %v803
    %v808 = vmul.f32 %v780, %v804
    %v809 = vadd.f32 %v797, 1.0
    %v810 = vadd.f32 %v798, 1.0
    %v811 = vadd.f32 %v799, 1.0
    %v812 = vadd.f32 %v800, 1.0
    %v813 = vrcp.pop %v809
    %v814 = vrcp.pop %v810
    %v815 = vrcp.pop %v811
    %v816 = vrcp.pop %v812
    %v817 = vmul.f32 %v805, %v813
    %v818 = vmul.f32 %v806, %v814
    %v819 = vmul.f32 %v807, %v815
    %v820 = vmul.f32 %v808, %v816
    %v821 = vpack.c.bf16 %v819, %v817
    %v822 = vpack.c.bf16 %v820, %v818
    %v823 = vld [vmem:[#allocation6] sm:$0xff]
    %v824 = vld [vmem:[#allocation6 + $0x8] sm:$0xff]
    %v825 = vld [vmem:[#allocation6 + $0x10] sm:$0xff]
    %v826 = vld [vmem:[#allocation6 + $0x18] sm:$0xff]
    %v827 = vld [vmem:[#allocation6 + $0x20] sm:$0xff]
    %v828 = vld [vmem:[#allocation6 + $0x28] sm:$0xff]
    %v829 = vld [vmem:[#allocation6 + $0x30] sm:$0xff]
    %v830 = vld [vmem:[#allocation6 + $0x38] sm:$0xff]
    %v831 = vld [vmem:[#allocation6 + $0x40] sm:$0xff]
    %v832 = vld [vmem:[#allocation6 + $0x48] sm:$0xff]
    %v833 = vld [vmem:[#allocation6 + $0x50] sm:$0xff]
    %v834 = vld [vmem:[#allocation6 + $0x58] sm:$0xff]
    %v835 = vld [vmem:[#allocation6 + $0x60] sm:$0xff]
    %v836 = vld [vmem:[#allocation6 + $0x68] sm:$0xff]
    %v837 = vld [vmem:[#allocation6 + $0x70] sm:$0xff]
    %v838 = vld [vmem:[#allocation6 + $0x78] sm:$0xff]
    %v839 = vld [vmem:[#allocation6 + $0x80] sm:$0xff]
    %v840 = vld [vmem:[#allocation6 + $0x88] sm:$0xff]
    %v841 = vld [vmem:[#allocation6 + $0x90] sm:$0xff]
    %v842 = vld [vmem:[#allocation6 + $0x98] sm:$0xff]
    %v843 = vld [vmem:[#allocation6 + $0xa0] sm:$0xff]
    %v844 = vld [vmem:[#allocation6 + $0xa8] sm:$0xff]
    %v845 = vld [vmem:[#allocation6 + $0xb0] sm:$0xff]
    %v846 = vld [vmem:[#allocation6 + $0xb8] sm:$0xff]
    %v847 = vld [vmem:[#allocation6 + $0xc0] sm:$0xff]
    %v848 = vld [vmem:[#allocation6 + $0xc8] sm:$0xff]
    %v849 = vld [vmem:[#allocation6 + $0xd0] sm:$0xff]
    %v850 = vld [vmem:[#allocation6 + $0xd8] sm:$0xff]
    %v851 = vld [vmem:[#allocation6 + $0xe0] sm:$0xff]
    %v852 = vld [vmem:[#allocation6 + $0xe8] sm:$0xff]
    %v853 = vld [vmem:[#allocation6 + $0xf0] sm:$0xff]
    %v854 = vld [vmem:[#allocation6 + $0xf8] sm:$0xff]
    %v855 = vld [vmem:[%s8] sm:$0x3]
    %v857 = vlaneseq
    %v858 = vshrl.u32 %v857, 7
    %v859 = vsub.s32 0, %v858
    %v860 = vrot.slane %v855, %v859
    %v861 = vlaneseq
    %v862 = vshrl.u32 %v861, 7
    %v863 = vsub.s32 1, %v862
    %v864 = vrot.slane %v855, %v863
    %v899 = vunpack.c.l.b16 %v823
    %v900 = vunpack.c.h.b16 %v823
    %v901 = vunpack.c.l.b16 %v824
    %v902 = vunpack.c.h.b16 %v824
    %v903 = vunpack.c.l.b16 %v825
    %v904 = vunpack.c.h.b16 %v825
    %v905 = vunpack.c.l.b16 %v826
    %v906 = vunpack.c.h.b16 %v826
    %v907 = vunpack.c.l.b16 %v827
    %v908 = vunpack.c.h.b16 %v827
    %v909 = vunpack.c.l.b16 %v828
    %v910 = vunpack.c.h.b16 %v828
    %v911 = vunpack.c.l.b16 %v829
    %v912 = vunpack.c.h.b16 %v829
    %v913 = vunpack.c.l.b16 %v830
    %v914 = vunpack.c.h.b16 %v830
    %v915 = vunpack.c.l.b16 %v831
    %v916 = vunpack.c.h.b16 %v831
    %v917 = vunpack.c.l.b16 %v832
    %v918 = vunpack.c.h.b16 %v832
    %v919 = vunpack.c.l.b16 %v833
    %v920 = vunpack.c.h.b16 %v833
    %v921 = vunpack.c.l.b16 %v834
    %v922 = vunpack.c.h.b16 %v834
    %v923 = vunpack.c.l.b16 %v835
    %v924 = vunpack.c.h.b16 %v835
    %v925 = vunpack.c.l.b16 %v836
    %v926 = vunpack.c.h.b16 %v836
    %v927 = vunpack.c.l.b16 %v837
    %v928 = vunpack.c.h.b16 %v837
    %v929 = vunpack.c.l.b16 %v838
    %v930 = vunpack.c.h.b16 %v838
    %v931 = vunpack.c.l.b16 %v839
    %v932 = vunpack.c.h.b16 %v839
    %v933 = vunpack.c.l.b16 %v840
    %v934 = vunpack.c.h.b16 %v840
    %v935 = vunpack.c.l.b16 %v841
    %v936 = vunpack.c.h.b16 %v841
    %v937 = vunpack.c.l.b16 %v842
    %v938 = vunpack.c.h.b16 %v842
    %v939 = vunpack.c.l.b16 %v843
    %v940 = vunpack.c.h.b16 %v843
    %v941 = vunpack.c.l.b16 %v844
    %v942 = vunpack.c.h.b16 %v844
    %v943 = vunpack.c.l.b16 %v845
    %v944 = vunpack.c.h.b16 %v845
    %v945 = vunpack.c.l.b16 %v846
    %v946 = vunpack.c.h.b16 %v846
    %v947 = vunpack.c.l.b16 %v847
    %v948 = vunpack.c.h.b16 %v847
    %v949 = vunpack.c.l.b16 %v848
    %v950 = vunpack.c.h.b16 %v848
    %v951 = vunpack.c.l.b16 %v849
    %v952 = vunpack.c.h.b16 %v849
    %v953 = vunpack.c.l.b16 %v850
    %v954 = vunpack.c.h.b16 %v850
    %v955 = vunpack.c.l.b16 %v851
    %v956 = vunpack.c.h.b16 %v851
    %v957 = vunpack.c.l.b16 %v852
    %v958 = vunpack.c.h.b16 %v852
    %v959 = vunpack.c.l.b16 %v853
    %v960 = vunpack.c.h.b16 %v853
    %v961 = vunpack.c.l.b16 %v854
    %v962 = vunpack.c.h.b16 %v854
    %v963 = vpack.c.b16 %v901, %v899
    %v964 = vpack.c.b16 %v902, %v900
    %v965 = vpack.c.b16 %v905, %v903
    %v966 = vpack.c.b16 %v906, %v904
    %v967 = vpack.c.b16 %v909, %v907
    %v968 = vpack.c.b16 %v910, %v908
    %v969 = vpack.c.b16 %v913, %v911
    %v970 = vpack.c.b16 %v914, %v912
    %v971 = vpack.c.b16 %v917, %v915
    %v972 = vpack.c.b16 %v918, %v916
    %v973 = vpack.c.b16 %v921, %v919
    %v974 = vpack.c.b16 %v922, %v920
    %v975 = vpack.c.b16 %v925, %v923
    %v976 = vpack.c.b16 %v926, %v924
    %v977 = vpack.c.b16 %v929, %v927
    %v978 = vpack.c.b16 %v930, %v928
    %v979 = vpack.c.b16 %v933, %v931
    %v980 = vpack.c.b16 %v934, %v932
    %v981 = vpack.c.b16 %v937, %v935
    %v982 = vpack.c.b16 %v938, %v936
    %v983 = vpack.c.b16 %v941, %v939
    %v984 = vpack.c.b16 %v942, %v940
    %v985 = vpack.c.b16 %v945, %v943
    %v986 = vpack.c.b16 %v946, %v944
    %v987 = vpack.c.b16 %v949, %v947
    %v988 = vpack.c.b16 %v950, %v948
    %v989 = vpack.c.b16 %v953, %v951
    %v990 = vpack.c.b16 %v954, %v952
    %v991 = vpack.c.b16 %v957, %v955
    %v992 = vpack.c.b16 %v958, %v956
    %v993 = vpack.c.b16 %v961, %v959
    %v994 = vpack.c.b16 %v962, %v960
    %1027 = vmatprep.subr.bf16.mxu0 %v978
    %1028 = vmatpush1.bf16.msra.mxu0 %v977
    %1029 = vmatprep.subr.bf16.mxu0 %v976
    %1030 = vmatpush1.bf16.msra.mxu0 %v975
    %1031 = vmatprep.subr.bf16.mxu0 %v974
    %1032 = vmatpush1.bf16.msra.mxu0 %v973
    %1033 = vmatprep.subr.bf16.mxu0 %v972
    %1034 = vmatpush1.bf16.msra.mxu0 %v971
    %1035 = vmatprep.subr.bf16.mxu0 %v970
    %1036 = vmatpush1.bf16.msra.mxu0 %v969
    %1037 = vmatprep.subr.bf16.mxu0 %v968
    %1038 = vmatpush1.bf16.msra.mxu0 %v967
    %1039 = vmatprep.subr.bf16.mxu0 %v966
    %1040 = vmatpush1.bf16.msra.mxu0 %v965
    %1041 = vmatprep.subr.bf16.mxu0 %v964
    %1042 = vmatpush1.bf16.msra.mxu0 %v963
    %1043 = vmatprep.subr.bf16.mxu0 %v994
    %1044 = vmatpush2.bf16.msra.mxu0 %v993
    %1045 = vmatprep.subr.bf16.mxu0 %v992
    %1046 = vmatpush2.bf16.msra.mxu0 %v991
    %1047 = vmatprep.subr.bf16.mxu0 %v990
    %1048 = vmatpush2.bf16.msra.mxu0 %v989
    %1049 = vmatprep.subr.bf16.mxu0 %v988
    %1050 = vmatpush2.bf16.msra.mxu0 %v987
    %1051 = vmatprep.subr.bf16.mxu0 %v986
    %1052 = vmatpush2.bf16.msra.mxu0 %v985
    %1053 = vmatprep.subr.bf16.mxu0 %v984
    %1054 = vmatpush2.bf16.msra.mxu0 %v983
    %1055 = vmatprep.subr.bf16.mxu0 %v982
    %1056 = vmatpush2.bf16.msra.mxu0 %v981
    %1057 = vmatprep.subr.bf16.mxu0 %v980
    %1058 = vmatpush2.bf16.msra.mxu0 %v979
    %1059 = vmatprep.mubr.bf16.mxu0 %v822
    %1060 = vmatmul.mubr.bf16.gmra.mxu0 %v821
    %v1061 = vpop.f32.mrf.mxu0
    %v1062 = vadd.f32 %v860, %v1061
    %v1063 = vpop.f32.mrf.mxu0
    %v1064 = vadd.f32 %v864, %v1063
    %v1065 = vpop.f32.mrf.mxu0
    %v1066 = vadd.f32 %v860, %v1065
    %v1067 = vpop.f32.mrf.mxu0
    %v1068 = vadd.f32 %v864, %v1067
    %1069 = vdwg.mxu0
    %v1070 = vmin.f32 %v1062, 20.0
    %v1071 = vmin.f32 %v1064, 20.0
    %v1072 = vmin.f32 %v1066, 20.0
    %v1073 = vmin.f32 %v1068, 20.0
    %v1074 = vmul.f32 %v1070, 1.442695
    %v1075 = vpow.pop %v1074
    %v1076 = vmul.f32 %v1071, 1.442695
    %v1077 = vpow.pop %v1076
    %v1078 = vmul.f32 %v1072, 1.442695
    %v1079 = vpow.pop %v1078
    %v1080 = vmul.f32 %v1073, 1.442695
    %v1081 = vpow.pop %v1080
    %v1082 = vadd.f32 %v1075, 1.0
    %v1083 = vadd.f32 %v1077, 1.0
    %v1084 = vadd.f32 %v1079, 1.0
    %v1085 = vadd.f32 %v1081, 1.0
    %v1086 = vmul.f32 %v1082, %v1082
    %v1087 = vmul.f32 %v1083, %v1083
    %v1088 = vmul.f32 %v1084, %v1084
    %v1089 = vmul.f32 %v1085, %v1085
    %v1090 = vsub.f32 %v1086, 1.0
    %v1091 = vsub.f32 %v1087, 1.0
    %v1092 = vsub.f32 %v1088, 1.0
    %v1093 = vsub.f32 %v1089, 1.0
    %v1094 = vmul.f32 %v1062, %v1090
    %v1095 = vmul.f32 %v1064, %v1091
    %v1096 = vmul.f32 %v1066, %v1092
    %v1097 = vmul.f32 %v1068, %v1093
    %v1098 = vadd.f32 %v1086, 1.0
    %v1099 = vadd.f32 %v1087, 1.0
    %v1100 = vadd.f32 %v1088, 1.0
    %v1101 = vadd.f32 %v1089, 1.0
    %v1102 = vrcp.pop %v1098
    %v1103 = vrcp.pop %v1099
    %v1104 = vrcp.pop %v1100
    %v1105 = vrcp.pop %v1101
    %v1106 = vmul.f32 %v1094, %v1102
    %v1107 = vmul.f32 %v1095, %v1103
    %v1108 = vmul.f32 %v1096, %v1104
    %v1109 = vmul.f32 %v1097, %v1105
    %v1110 = vpack.c.bf16 %v1108, %v1106
    %v1111 = vpack.c.bf16 %v1109, %v1107
    %v1112 = vld [vmem:[#allocation7] sm:$0xff]
    %v1113 = vld [vmem:[#allocation7 + $0x8] sm:$0xff]
    %v1114 = vld [vmem:[#allocation7 + $0x10] sm:$0xff]
    %v1115 = vld [vmem:[#allocation7 + $0x18] sm:$0xff]
    %v1116 = vld [vmem:[#allocation7 + $0x20] sm:$0xff]
    %v1117 = vld [vmem:[#allocation7 + $0x28] sm:$0xff]
    %v1118 = vld [vmem:[#allocation7 + $0x30] sm:$0xff]
    %v1119 = vld [vmem:[#allocation7 + $0x38] sm:$0xff]
    %v1120 = vld [vmem:[#allocation7 + $0x40] sm:$0xff]
    %v1121 = vld [vmem:[#allocation7 + $0x48] sm:$0xff]
    %v1122 = vld [vmem:[#allocation7 + $0x50] sm:$0xff]
    %v1123 = vld [vmem:[#allocation7 + $0x58] sm:$0xff]
    %v1124 = vld [vmem:[#allocation7 + $0x60] sm:$0xff]
    %v1125 = vld [vmem:[#allocation7 + $0x68] sm:$0xff]
    %v1126 = vld [vmem:[#allocation7 + $0x70] sm:$0xff]
    %v1127 = vld [vmem:[#allocation7 + $0x78] sm:$0xff]
    %v1128 = vld [vmem:[#allocation7 + $0x80] sm:$0xff]
    %v1129 = vld [vmem:[#allocation7 + $0x88] sm:$0xff]
    %v1130 = vld [vmem:[#allocation7 + $0x90] sm:$0xff]
    %v1131 = vld [vmem:[#allocation7 + $0x98] sm:$0xff]
    %v1132 = vld [vmem:[#allocation7 + $0xa0] sm:$0xff]
    %v1133 = vld [vmem:[#allocation7 + $0xa8] sm:$0xff]
    %v1134 = vld [vmem:[#allocation7 + $0xb0] sm:$0xff]
    %v1135 = vld [vmem:[#allocation7 + $0xb8] sm:$0xff]
    %v1136 = vld [vmem:[#allocation7 + $0xc0] sm:$0xff]
    %v1137 = vld [vmem:[#allocation7 + $0xc8] sm:$0xff]
    %v1138 = vld [vmem:[#allocation7 + $0xd0] sm:$0xff]
    %v1139 = vld [vmem:[#allocation7 + $0xd8] sm:$0xff]
    %v1140 = vld [vmem:[#allocation7 + $0xe0] sm:$0xff]
    %v1141 = vld [vmem:[#allocation7 + $0xe8] sm:$0xff]
    %v1142 = vld [vmem:[#allocation7 + $0xf0] sm:$0xff]
    %v1143 = vld [vmem:[#allocation7 + $0xf8] sm:$0xff]
    %v1144 = vld [vmem:[%s10] sm:$0x3]
    %v1146 = vlaneseq
    %v1147 = vshrl.u32 %v1146, 7
    %v1148 = vsub.s32 0, %v1147
    %v1149 = vrot.slane %v1144, %v1148
    %v1150 = vlaneseq
    %v1151 = vshrl.u32 %v1150, 7
    %v1152 = vsub.s32 1, %v1151
    %v1153 = vrot.slane %v1144, %v1152
    %v1188 = vunpack.c.l.b16 %v1112
    %v1189 = vunpack.c.h.b16 %v1112
    %v1190 = vunpack.c.l.b16 %v1113
    %v1191 = vunpack.c.h.b16 %v1113
    %v1192 = vunpack.c.l.b16 %v1114
    %v1193 = vunpack.c.h.b16 %v1114
    %v1194 = vunpack.c.l.b16 %v1115
    %v1195 = vunpack.c.h.b16 %v1115
    %v1196 = vunpack.c.l.b16 %v1116
    %v1197 = vunpack.c.h.b16 %v1116
    %v1198 = vunpack.c.l.b16 %v1117
    %v1199 = vunpack.c.h.b16 %v1117
    %v1200 = vunpack.c.l.b16 %v1118
    %v1201 = vunpack.c.h.b16 %v1118
    %v1202 = vunpack.c.l.b16 %v1119
    %v1203 = vunpack.c.h.b16 %v1119
    %v1204 = vunpack.c.l.b16 %v1120
    %v1205 = vunpack.c.h.b16 %v1120
    %v1206 = vunpack.c.l.b16 %v1121
    %v1207 = vunpack.c.h.b16 %v1121
    %v1208 = vunpack.c.l.b16 %v1122
    %v1209 = vunpack.c.h.b16 %v1122
    %v1210 = vunpack.c.l.b16 %v1123
    %v1211 = vunpack.c.h.b16 %v1123
    %v1212 = vunpack.c.l.b16 %v1124
    %v1213 = vunpack.c.h.b16 %v1124
    %v1214 = vunpack.c.l.b16 %v1125
    %v1215 = vunpack.c.h.b16 %v1125
    %v1216 = vunpack.c.l.b16 %v1126
    %v1217 = vunpack.c.h.b16 %v1126
    %v1218 = vunpack.c.l.b16 %v1127
    %v1219 = vunpack.c.h.b16 %v1127
    %v1220 = vunpack.c.l.b16 %v1128
    %v1221 = vunpack.c.h.b16 %v1128
    %v1222 = vunpack.c.l.b16 %v1129
    %v1223 = vunpack.c.h.b16 %v1129
    %v1224 = vunpack.c.l.b16 %v1130
    %v1225 = vunpack.c.h.b16 %v1130
    %v1226 = vunpack.c.l.b16 %v1131
    %v1227 = vunpack.c.h.b16 %v1131
    %v1228 = vunpack.c.l.b16 %v1132
    %v1229 = vunpack.c.h.b16 %v1132
    %v1230 = vunpack.c.l.b16 %v1133
    %v1231 = vunpack.c.h.b16 %v1133
    %v1232 = vunpack.c.l.b16 %v1134
    %v1233 = vunpack.c.h.b16 %v1134
    %v1234 = vunpack.c.l.b16 %v1135
    %v1235 = vunpack.c.h.b16 %v1135
    %v1236 = vunpack.c.l.b16 %v1136
    %v1237 = vunpack.c.h.b16 %v1136
    %v1238 = vunpack.c.l.b16 %v1137
    %v1239 = vunpack.c.h.b16 %v1137
    %v1240 = vunpack.c.l.b16 %v1138
    %v1241 = vunpack.c.h.b16 %v1138
    %v1242 = vunpack.c.l.b16 %v1139
    %v1243 = vunpack.c.h.b16 %v1139
    %v1244 = vunpack.c.l.b16 %v1140
    %v1245 = vunpack.c.h.b16 %v1140
    %v1246 = vunpack.c.l.b16 %v1141
    %v1247 = vunpack.c.h.b16 %v1141
    %v1248 = vunpack.c.l.b16 %v1142
    %v1249 = vunpack.c.h.b16 %v1142
    %v1250 = vunpack.c.l.b16 %v1143
    %v1251 = vunpack.c.h.b16 %v1143
    %v1252 = vpack.c.b16 %v1190, %v1188
    %v1253 = vpack.c.b16 %v1191, %v1189
    %v1254 = vpack.c.b16 %v1194, %v1192
    %v1255 = vpack.c.b16 %v1195, %v1193
    %v1256 = vpack.c.b16 %v1198, %v1196
    %v1257 = vpack.c.b16 %v1199, %v1197
    %v1258 = vpack.c.b16 %v1202, %v1200
    %v1259 = vpack.c.b16 %v1203, %v1201
    %v1260 = vpack.c.b16 %v1206, %v1204
    %v1261 = vpack.c.b16 %v1207, %v1205
    %v1262 = vpack.c.b16 %v1210, %v1208
    %v1263 = vpack.c.b16 %v1211, %v1209
    %v1264 = vpack.c.b16 %v1214, %v1212
    %v1265 = vpack.c.b16 %v1215, %v1213
    %v1266 = vpack.c.b16 %v1218, %v1216
    %v1267 = vpack.c.b16 %v1219, %v1217
    %v1268 = vpack.c.b16 %v1222, %v1220
    %v1269 = vpack.c.b16 %v1223, %v1221
    %v1270 = vpack.c.b16 %v1226, %v1224
    %v1271 = vpack.c.b16 %v1227, %v1225
    %v1272 = vpack.c.b16 %v1230, %v1228
    %v1273 = vpack.c.b16 %v1231, %v1229
    %v1274 = vpack.c.b16 %v1234, %v1232
    %v1275 = vpack.c.b16 %v1235, %v1233
    %v1276 = vpack.c.b16 %v1238, %v1236
    %v1277 = vpack.c.b16 %v1239, %v1237
    %v1278 = vpack.c.b16 %v1242, %v1240
    %v1279 = vpack.c.b16 %v1243, %v1241
    %v1280 = vpack.c.b16 %v1246, %v1244
    %v1281 = vpack.c.b16 %v1247, %v1245
    %v1282 = vpack.c.b16 %v1250, %v1248
    %v1283 = vpack.c.b16 %v1251, %v1249
    %1316 = vmatprep.subr.bf16.mxu0 %v1267
    %1317 = vmatpush1.bf16.msra.mxu0 %v1266
    %1318 = vmatprep.subr.bf16.mxu0 %v1265
    %1319 = vmatpush1.bf16.msra.mxu0 %v1264
    %1320 = vmatprep.subr.bf16.mxu0 %v1263
    %1321 = vmatpush1.bf16.msra.mxu0 %v1262
    %1322 = vmatprep.subr.bf16.mxu0 %v1261
    %1323 = vmatpush1.bf16.msra.mxu0 %v1260
    %1324 = vmatprep.subr.bf16.mxu0 %v1259
    %1325 = vmatpush1.bf16.msra.mxu0 %v1258
    %1326 = vmatprep.subr.bf16.mxu0 %v1257
    %1327 = vmatpush1.bf16.msra.mxu0 %v1256
    %1328 = vmatprep.subr.bf16.mxu0 %v1255
    %1329 = vmatpush1.bf16.msra.mxu0 %v1254
    %1330 = vmatprep.subr.bf16.mxu0 %v1253
    %1331 = vmatpush1.bf16.msra.mxu0 %v1252
    %1332 = vmatprep.subr.bf16.mxu0 %v1283
    %1333 = vmatpush2.bf16.msra.mxu0 %v1282
    %1334 = vmatprep.subr.bf16.mxu0 %v1281
    %1335 = vmatpush2.bf16.msra.mxu0 %v1280
    %1336 = vmatprep.subr.bf16.mxu0 %v1279
    %1337 = vmatpush2.bf16.msra.mxu0 %v1278
    %1338 = vmatprep.subr.bf16.mxu0 %v1277
    %1339 = vmatpush2.bf16.msra.mxu0 %v1276
    %1340 = vmatprep.subr.bf16.mxu0 %v1275
    %1341 = vmatpush2.bf16.msra.mxu0 %v1274
    %1342 = vmatprep.subr.bf16.mxu0 %v1273
    %1343 = vmatpush2.bf16.msra.mxu0 %v1272
    %1344 = vmatprep.subr.bf16.mxu0 %v1271
    %1345 = vmatpush2.bf16.msra.mxu0 %v1270
    %1346 = vmatprep.subr.bf16.mxu0 %v1269
    %1347 = vmatpush2.bf16.msra.mxu0 %v1268
    %1348 = vmatprep.mubr.bf16.mxu0 %v1111
    %1349 = vmatmul.mubr.bf16.gmra.mxu0 %v1110
    %v1350 = vpop.f32.mrf.mxu0
    %v1351 = vadd.f32 %v1149, %v1350
    %v1352 = vpop.f32.mrf.mxu0
    %v1353 = vadd.f32 %v1153, %v1352
    %v1354 = vpop.f32.mrf.mxu0
    %v1355 = vadd.f32 %v1149, %v1354
    %v1356 = vpop.f32.mrf.mxu0
    %v1357 = vadd.f32 %v1153, %v1356
    %1358 = vdwg.mxu0
    %v1359 = vmin.f32 %v1351, 20.0
    %v1360 = vmin.f32 %v1353, 20.0
    %v1361 = vmin.f32 %v1355, 20.0
    %v1362 = vmin.f32 %v1357, 20.0
    %v1363 = vmul.f32 %v1359, 1.442695
    %v1364 = vpow.pop %v1363
    %v1365 = vmul.f32 %v1360, 1.442695
    %v1366 = vpow.pop %v1365
    %v1367 = vmul.f32 %v1361, 1.442695
    %v1368 = vpow.pop %v1367
    %v1369 = vmul.f32 %v1362, 1.442695
    %v1370 = vpow.pop %v1369
    %v1371 = vadd.f32 %v1364, 1.0
    %v1372 = vadd.f32 %v1366, 1.0
    %v1373 = vadd.f32 %v1368, 1.0
    %v1374 = vadd.f32 %v1370, 1.0
    %v1375 = vmul.f32 %v1371, %v1371
    %v1376 = vmul.f32 %v1372, %v1372
    %v1377 = vmul.f32 %v1373, %v1373
    %v1378 = vmul.f32 %v1374, %v1374
    %v1379 = vsub.f32 %v1375, 1.0
    %v1380 = vsub.f32 %v1376, 1.0
    %v1381 = vsub.f32 %v1377, 1.0
    %v1382 = vsub.f32 %v1378, 1.0
    %v1383 = vmul.f32 %v1351, %v1379
    %v1384 = vmul.f32 %v1353, %v1380
    %v1385 = vmul.f32 %v1355, %v1381
    %v1386 = vmul.f32 %v1357, %v1382
    %v1387 = vadd.f32 %v1375, 1.0
    %v1388 = vadd.f32 %v1376, 1.0
    %v1389 = vadd.f32 %v1377, 1.0
    %v1390 = vadd.f32 %v1378, 1.0
    %v1391 = vrcp.pop %v1387
    %v1392 = vrcp.pop %v1388
    %v1393 = vrcp.pop %v1389
    %v1394 = vrcp.pop %v1390
    %v1395 = vmul.f32 %v1383, %v1391
    %v1396 = vmul.f32 %v1384, %v1392
    %v1397 = vmul.f32 %v1385, %v1393
    %v1398 = vmul.f32 %v1386, %v1394
    %v1399 = vpack.c.bf16 %v1397, %v1395
    %v1400 = vpack.c.bf16 %v1398, %v1396
    %v1401 = vld [vmem:[#allocation9] sm:$0xf]
    %v1402 = vld [vmem:[#allocation9 + $0x4] sm:$0xf]
    %v1403 = vld [vmem:[#allocation9 + $0x8] sm:$0xf]
    %v1404 = vld [vmem:[#allocation9 + $0xc] sm:$0xf]
    %v1405 = vld [vmem:[#allocation9 + $0x10] sm:$0xf]
    %v1406 = vld [vmem:[#allocation9 + $0x14] sm:$0xf]
    %v1407 = vld [vmem:[#allocation9 + $0x18] sm:$0xf]
    %v1408 = vld [vmem:[#allocation9 + $0x1c] sm:$0xf]
    %v1409 = vld [vmem:[#allocation9 + $0x20] sm:$0xf]
    %v1410 = vld [vmem:[#allocation9 + $0x24] sm:$0xf]
    %v1411 = vld [vmem:[#allocation9 + $0x28] sm:$0xf]
    %v1412 = vld [vmem:[#allocation9 + $0x2c] sm:$0xf]
    %v1413 = vld [vmem:[#allocation9 + $0x30] sm:$0xf]
    %v1414 = vld [vmem:[#allocation9 + $0x34] sm:$0xf]
    %v1415 = vld [vmem:[#allocation9 + $0x38] sm:$0xf]
    %v1416 = vld [vmem:[#allocation9 + $0x3c] sm:$0xf]
    %v1417 = vld [vmem:[#allocation9 + $0x40] sm:$0xf]
    %v1418 = vld [vmem:[#allocation9 + $0x44] sm:$0xf]
    %v1419 = vld [vmem:[#allocation9 + $0x48] sm:$0xf]
    %v1420 = vld [vmem:[#allocation9 + $0x4c] sm:$0xf]
    %v1421 = vld [vmem:[#allocation9 + $0x50] sm:$0xf]
    %v1422 = vld [vmem:[#allocation9 + $0x54] sm:$0xf]
    %v1423 = vld [vmem:[#allocation9 + $0x58] sm:$0xf]
    %v1424 = vld [vmem:[#allocation9 + $0x5c] sm:$0xf]
    %v1425 = vld [vmem:[#allocation9 + $0x60] sm:$0xf]
    %v1426 = vld [vmem:[#allocation9 + $0x64] sm:$0xf]
    %v1427 = vld [vmem:[#allocation9 + $0x68] sm:$0xf]
    %v1428 = vld [vmem:[#allocation9 + $0x6c] sm:$0xf]
    %v1429 = vld [vmem:[#allocation9 + $0x70] sm:$0xf]
    %v1430 = vld [vmem:[#allocation9 + $0x74] sm:$0xf]
    %v1431 = vld [vmem:[#allocation9 + $0x78] sm:$0xf]
    %v1432 = vld [vmem:[#allocation9 + $0x7c] sm:$0xf]
    %v1433 = vld [vmem:[%s12] sm:$0x1]
    %v1435 = vlaneseq
    %v1436 = vshrl.u32 %v1435, 7
    %v1437 = vsub.s32 0, %v1436
    %v1438 = vrot.slane %v1433, %v1437
    %v1472 = vunpack.c.l.b16 %v1401
    %v1473 = vunpack.c.l.b16 %v1402
    %v1474 = vunpack.c.l.b16 %v1403
    %v1475 = vunpack.c.l.b16 %v1404
    %v1476 = vunpack.c.l.b16 %v1405
    %v1477 = vunpack.c.l.b16 %v1406
    %v1478 = vunpack.c.l.b16 %v1407
    %v1479 = vunpack.c.l.b16 %v1408
    %v1480 = vunpack.c.l.b16 %v1409
    %v1481 = vunpack.c.l.b16 %v1410
    %v1482 = vunpack.c.l.b16 %v1411
    %v1483 = vunpack.c.l.b16 %v1412
    %v1484 = vunpack.c.l.b16 %v1413
    %v1485 = vunpack.c.l.b16 %v1414
    %v1486 = vunpack.c.l.b16 %v1415
    %v1487 = vunpack.c.l.b16 %v1416
    %v1488 = vunpack.c.l.b16 %v1417
    %v1489 = vunpack.c.l.b16 %v1418
    %v1490 = vunpack.c.l.b16 %v1419
    %v1491 = vunpack.c.l.b16 %v1420
    %v1492 = vunpack.c.l.b16 %v1421
    %v1493 = vunpack.c.l.b16 %v1422
    %v1494 = vunpack.c.l.b16 %v1423
    %v1495 = vunpack.c.l.b16 %v1424
    %v1496 = vunpack.c.l.b16 %v1425
    %v1497 = vunpack.c.l.b16 %v1426
    %v1498 = vunpack.c.l.b16 %v1427
    %v1499 = vunpack.c.l.b16 %v1428
    %v1500 = vunpack.c.l.b16 %v1429
    %v1501 = vunpack.c.l.b16 %v1430
    %v1502 = vunpack.c.l.b16 %v1431
    %v1503 = vunpack.c.l.b16 %v1432
    %v1504 = vpack.c.b16 %v1473, %v1472
    %v1505 = vpack.c.b16 %v1475, %v1474
    %v1506 = vpack.c.b16 %v1477, %v1476
    %v1507 = vpack.c.b16 %v1479, %v1478
    %v1508 = vpack.c.b16 %v1481, %v1480
    %v1509 = vpack.c.b16 %v1483, %v1482
    %v1510 = vpack.c.b16 %v1485, %v1484
    %v1511 = vpack.c.b16 %v1487, %v1486
    %v1512 = vpack.c.b16 %v1489, %v1488
    %v1513 = vpack.c.b16 %v1491, %v1490
    %v1514 = vpack.c.b16 %v1493, %v1492
    %v1515 = vpack.c.b16 %v1495, %v1494
    %v1516 = vpack.c.b16 %v1497, %v1496
    %v1517 = vpack.c.b16 %v1499, %v1498
    %v1518 = vpack.c.b16 %v1501, %v1500
    %v1519 = vpack.c.b16 %v1503, %v1502
    %1536 = vmatprep.subr.bf16.mxu0 0
    %1537 = vmatpush1.bf16.msra.mxu0 %v1511
    %1538 = vmatprep.subr.bf16.mxu0 0
    %1539 = vmatpush1.bf16.msra.mxu0 %v1510
    %1540 = vmatprep.subr.bf16.mxu0 0
    %1541 = vmatpush1.bf16.msra.mxu0 %v1509
    %1542 = vmatprep.subr.bf16.mxu0 0
    %1543 = vmatpush1.bf16.msra.mxu0 %v1508
    %1544 = vmatprep.subr.bf16.mxu0 0
    %1545 = vmatpush1.bf16.msra.mxu0 %v1507
    %1546 = vmatprep.subr.bf16.mxu0 0
    %1547 = vmatpush1.bf16.msra.mxu0 %v1506
    %1548 = vmatprep.subr.bf16.mxu0 0
    %1549 = vmatpush1.bf16.msra.mxu0 %v1505
    %1550 = vmatprep.subr.bf16.mxu0 0
    %1551 = vmatpush1.bf16.msra.mxu0 %v1504
    %1552 = vmatprep.subr.bf16.mxu0 0
    %1553 = vmatpush2.bf16.msra.mxu0 %v1519
    %1554 = vmatprep.subr.bf16.mxu0 0
    %1555 = vmatpush2.bf16.msra.mxu0 %v1518
    %1556 = vmatprep.subr.bf16.mxu0 0
    %1557 = vmatpush2.bf16.msra.mxu0 %v1517
    %1558 = vmatprep.subr.bf16.mxu0 0
    %1559 = vmatpush2.bf16.msra.mxu0 %v1516
    %1560 = vmatprep.subr.bf16.mxu0 0
    %1561 = vmatpush2.bf16.msra.mxu0 %v1515
    %1562 = vmatprep.subr.bf16.mxu0 0
    %1563 = vmatpush2.bf16.msra.mxu0 %v1514
    %1564 = vmatprep.subr.bf16.mxu0 0
    %1565 = vmatpush2.bf16.msra.mxu0 %v1513
    %1566 = vmatprep.subr.bf16.mxu0 0
    %1567 = vmatpush2.bf16.msra.mxu0 %v1512
    %1568 = vmatprep.mubr.bf16.mxu0 %v1400
    %1569 = vmatmul.mubr.bf16.gmra.mxu0 %v1399
    %v1570 = vpop.f32.mrf.mxu0
    %v1571 = vadd.f32 %v1438, %v1570
    %v1572 = vpop.f32.mrf.mxu0
    %v1573 = vpop.f32.mrf.mxu0
    %v1574 = vadd.f32 %v1438, %v1573
    %v1575 = vpop.f32.mrf.mxu0
    %1576 = vdwg.mxu0
    %1577 = vst [vmem:[%s13] sm:$0xff] %v1571
    %1578 = vst [vmem:[%s13 + $0x8] sm:$0xff] %v1574
    // Predicated region
    $region74: #{_lambda_.1} parent=1 // pred_check
      _
    $region75: #{_lambda_.1} parent=1 // pred_check_branch
      %1580 = sbr.rel (0) target = $region77
    $region76: #{_lambda_.1} parent=1 // pred_region
      _
    $region77: #{_lambda_.1} parent=1 // pred_fallthru
      _
    // Predicated region
    $region78: #{_lambda_.1} parent=1 // pred_check
      _
    $region79: #{_lambda_.1} parent=1 // pred_check_branch
      %1582 = sbr.rel (0) target = $region81
    $region80: #{_lambda_.1} parent=1 // pred_region
      _
    $region81: #{_lambda_.1} parent=1 // pred_fallthru
      _
    %1583 = vsyncpa [#allocation3], 1
    %1584 = vsyncpa [#allocation5], 1
    %1585 = vsyncpa [#allocation8], 1

</llo_original>
